<compile_context>
chip_gen: v7x
topology: tpu7x:2x2x1
jax: 0.10.0
libtpu: 0.0.40
codegen_flags: <defaults>
</compile_context>

<pallas_src>
import math

import jax
import jax.numpy as jnp
from jax.experimental import pallas as pl
from jax.experimental.pallas import tpu as pltpu


# ---------------------------------------------------------------------------
# Fused kernel: qkv linear -> head-batched window attention -> output proj
# ---------------------------------------------------------------------------
def _fused_attention_kernel(x_ref, qkvw_ref, qkvb_ref, bias_ref, pw_ref, pb_ref,
                            o_ref):
    _, M, C = x_ref.shape             # M = Tb * N tokens handled by this program
    H, N, _ = bias_ref.shape
    D = C // H
    Tb = M // N
    w_dtype = qkvw_ref.dtype          # MXU operand dtype (bf16 by default)

    # --- qkv projection: one big (M, C) @ (C, 3C) matmul ---------------------
    # Weights were pre-cast to w_dtype at prepare time; x is cast once here.
    # The softmax scale is pre-folded into the q columns of qkv_w / qkv_b.
    qkv = jnp.dot(x_ref[0].astype(w_dtype), qkvw_ref[...],
                  preferred_element_type=jnp.float32)            # (M, 3C) f32
    qkv = (qkv + qkvb_ref[...]).reshape(Tb, N, 3 * C)

    # --- head-batched q/k/v: (H*Tb, N, D) ------------------------------------
    # Heads are pulled out of the lane dim ONCE (slice + stack on a leading
    # axis) so the attention below is a single batched dot_general stream with
    # one bias add and one softmax pass, instead of H separate per-head matmuls
    # with H live score tensors and a lane-dim concatenate afterwards.
    q = jnp.stack([qkv[:, :, h * D:(h + 1) * D] for h in range(H)])
    k = jnp.stack([qkv[:, :, C + h * D:C + (h + 1) * D] for h in range(H)])
    v = jnp.stack([qkv[:, :, 2 * C + h * D:2 * C + (h + 1) * D] for h in range(H)])
    q = q.reshape(H * Tb, N, D).astype(w_dtype)
    k = k.reshape(H * Tb, N, D).astype(w_dtype)
    v = v.reshape(H * Tb, N, D).astype(w_dtype)

    # --- scores + relative-position bias + exact softmax (all f32) -----------
    s = jax.lax.dot_general(q, k, (((2,), (2,)), ((0,), (0,))),
                            preferred_element_type=jnp.float32)  # (H*Tb, N, N)
    s = s.reshape(H, Tb, N, N) + bias_ref[...][:, None, :, :]
    s = s - jnp.max(s, axis=-1, keepdims=True)
    p = jnp.exp(s)
    p = p * pl.reciprocal(jnp.sum(p, axis=-1, keepdims=True), approx=False)
    p = p.reshape(H * Tb, N, N).astype(w_dtype)

    # --- attention output ----------------------------------------------------
    o = jax.lax.dot_general(p, v, (((2,), (1,)), ((0,), (0,))),
                            preferred_element_type=jnp.float32)  # (H*Tb, N, D)
    o = o.reshape(H, M, D).astype(w_dtype)

    # --- output projection, folded per head ----------------------------------
    # proj_w rows were regrouped to (H, D, C) at prepare time (the module's
    # (attn@v).permute(...).reshape -> c = d*H + h flattening), so each head is
    # contracted directly and accumulated -- no lane-dim concatenate needed.
    y = jnp.dot(o[0], pw_ref[0], preferred_element_type=jnp.float32)
    for h in range(1, H):
        y = y + jnp.dot(o[h], pw_ref[h], preferred_element_type=jnp.float32)
    y = y + pb_ref[...]
    o_ref[0] = y.astype(o_ref.dtype)


# ---------------------------------------------------------------------------
# Generation-aware block sizing
# ---------------------------------------------------------------------------
def _round_up(x, m):
    return (x + m - 1) // m * m


def _tile_bytes(rows, cols, itemsize):
    """VMEM footprint of a (rows, cols) tile incl. (8, 128) padding."""
    return _round_up(max(rows, 1), 8) * _round_up(max(cols, 1), 128) * itemsize


def _vmem_capacity_bytes():
    try:
        return int(pltpu.get_tpu_info().vmem_capacity_bytes)
    except Exception:
        return 64 * 1024 * 1024        # conservative (v7x per-TC) fallback


def _vmem_needed(Tb, N, C, H, w_itemsize):
    """Per-grid-step VMEM estimate: double-buffered x/out blocks, f32 qkv
    intermediate, head-batched q/k/v + casts, f32 scores + cast, attention
    output, proj accumulator, and the resident weights (2x to be safe)."""
    D = C // H
    M = Tb * N
    b = 0
    b += 2 * 2 * _tile_bytes(M, C, 4)                                   # x / out blocks
    b += _tile_bytes(M, 3 * C, 4)                                       # qkv f32
    b += 3 * H * Tb * (_tile_bytes(N, D, 4) + _tile_bytes(N, D, w_itemsize))   # q/k/v
    b += H * Tb * (2 * _tile_bytes(N, N, 4) + _tile_bytes(N, N, w_itemsize))   # scores/p
    b += H * Tb * (_tile_bytes(N, D, 4) + _tile_bytes(N, D, w_itemsize))       # attn out
    b += 2 * _tile_bytes(M, C, 4)                                       # proj acc headroom
    b += 2 * (_tile_bytes(C, 3 * C, w_itemsize) + H * _tile_bytes(D, C, w_itemsize)
              + H * _tile_bytes(N, N, 4) + _tile_bytes(1, 3 * C, 4) + _tile_bytes(1, C, 4))
    return b


def _pick_block_t(T, N, C, H, B, w_itemsize, vmem_cap):
    """Largest Tb (divisor of T, valid block shape) that fits the VMEM budget;
    picking the largest also maximises the (Tb*N) MXU M-fill.  Keeps >= 2 grid
    steps overall so v7x's two TensorCores both get work."""
    budget = int(vmem_cap * 0.7)       # headroom for compiler temporaries
    def valid(d):
        return T % d == 0 and ((d * N) % 8 == 0 or d == T)
    cands = [d for d in range(1, T + 1) if valid(d)]
    feas = [d for d in cands if _vmem_needed(d, N, C, H, w_itemsize) <= budget]
    if not feas:
        feas = [min(cands)]
    tb = max(feas)
    if B * (T // tb) < 2:              # megacore: want >= 2 parallel steps
        smaller = [d for d in feas if (T // d) >= 2]
        if smaller:
            tb = max(smaller)
    return tb


def attention_forward(x, prepared, num_heads):
    """x: (B, T, N, C); prepared: output of prepare_params()."""
    B, T, N, C = x.shape
    H = num_heads
    D = C // H
    w_itemsize = jnp.dtype(prepared["qkv_w"].dtype).itemsize
    cap = _vmem_capacity_bytes()
    Tb = _pick_block_t(T, N, C, H, B, w_itemsize, cap)
    M = Tb * N
    need = _vmem_needed(Tb, N, C, H, w_itemsize)
    vmem_limit = int(min(cap * 3 // 4, max(32 * 1024 * 1024, need * 2)))

    # Free, contiguous HBM reshape: the kernel sees plain (M, C) token slabs.
    x_flat = x.reshape(B, T * N, C)

    out = pl.pallas_call(
        _fused_attention_kernel,
        out_shape=jax.ShapeDtypeStruct((B, T * N, C), x.dtype),
        grid=(B, T // Tb),
        in_specs=[
            pl.BlockSpec((1, M, C), lambda b, t: (b, t, 0)),
            pl.BlockSpec((C, 3 * C), lambda b, t: (0, 0)),          # resident
            pl.BlockSpec((1, 3 * C), lambda b, t: (0, 0)),          # resident
            pl.BlockSpec((H, N, N), lambda b, t: (0, 0, 0)),        # resident
            pl.BlockSpec((H, D, C), lambda b, t: (0, 0, 0)),        # resident
            pl.BlockSpec((1, C), lambda b, t: (0, 0)),              # resident
        ],
        out_specs=pl.BlockSpec((1, M, C), lambda b, t: (b, t, 0)),
        compiler_params=pltpu.CompilerParams(
            dimension_semantics=("parallel", "parallel"),
            vmem_limit_bytes=vmem_limit),
    )(x_flat, prepared["qkv_w"], prepared["qkv_b"], prepared["attn_bias"],
      prepared["proj_w"], prepared["proj_b"])
    return out.reshape(B, T, N, C)


# ---------------------------------------------------------------------------
# Parameter construction / preparation (plain JAX, done once)
# ---------------------------------------------------------------------------
def relative_position_index(window_size):
    Wh, Ww = window_size
    coords = jnp.stack(jnp.meshgrid(jnp.arange(Wh), jnp.arange(Ww), indexing="ij"))
    coords_flatten = coords.reshape(2, -1)                         # (2, N)
    rel = coords_flatten[:, :, None] - coords_flatten[:, None, :]  # (2, N, N)
    rel = rel.transpose(1, 2, 0)                                   # (N, N, 2)
    rel = rel.at[:, :, 0].add(Wh - 1)
    rel = rel.at[:, :, 1].add(Ww - 1)
    rel = rel.at[:, :, 0].multiply(2 * Ww - 1)
    return rel.sum(-1)                                             # (N, N)


def init_params(key, dim, num_heads, window_size, qkv_bias=False):
    Wh, Ww = window_size
    k1, k2, k3, k4 = jax.random.split(key, 4)
    table_rows = (2 * Wh - 1) * (2 * Ww - 1)
    return {
        # trunc_normal_(std=0.02)
        "rel_bias_table": 0.02 * jax.random.truncated_normal(
            k1, -2.0, 2.0, (table_rows, num_heads), dtype=jnp.float32),
        # stored transposed vs. PyTorch: (in, out) so forward is x @ w
        "qkv_w": jax.random.normal(k2, (dim, 3 * dim), dtype=jnp.float32)
                 * (1.0 / math.sqrt(dim)),
        "qkv_b": (jax.random.normal(k4, (3 * dim,), dtype=jnp.float32) * 0.02
                  if qkv_bias else jnp.zeros((3 * dim,), dtype=jnp.float32)),
        "proj_w": jax.random.normal(k3, (dim, dim), dtype=jnp.float32)
                  * (1.0 / math.sqrt(dim)),
        "proj_b": jnp.zeros((dim,), dtype=jnp.float32),
    }


def prepare_params(params, dim, num_heads, window_size, mxu_dtype=jnp.bfloat16):
    """One-time parameter preparation:
       * gather the (H, N, N) relative-position bias once (f32),
       * fold the softmax scale into the q slice of qkv_w / qkv_b,
       * regroup proj_w rows per head -> (H, D, C) (the module's d*H+h
         output flattening), so the kernel never concatenates head outputs,
       * pre-cast the matmul weights to the MXU operand dtype (bf16 default);
         biases stay f32 (added to the f32 accumulators)."""
    C, H = dim, num_heads
    D = C // H
    scale = D ** (-0.5)
    Wh, Ww = window_size
    N = Wh * Ww

    rpi = relative_position_index(window_size)
    bias = params["rel_bias_table"][rpi.reshape(-1)].reshape(N, N, H)
    bias = bias.transpose(2, 0, 1).astype(jnp.float32)             # (H, N, N)

    qkv_w = params["qkv_w"].at[:, :C].multiply(scale)
    qkv_b = params["qkv_b"].at[:C].multiply(scale)

    proj_w = params["proj_w"].reshape(D, H, C).transpose(1, 0, 2)  # (H, D, C)

    return {
        "qkv_w": qkv_w.astype(mxu_dtype),
        "qkv_b": qkv_b.reshape(1, 3 * C).astype(jnp.float32),
        "attn_bias": bias,
        "proj_w": proj_w.astype(mxu_dtype),
        "proj_b": params["proj_b"].reshape(1, C).astype(jnp.float32),
    }


# ---------------------------------------------------------------------------
# Pure-JAX reference (exact mirror of the PyTorch module, unprepared params)
# ---------------------------------------------------------------------------
def reference_forward(x, params, num_heads, window_size):
    B, T, N, C = x.shape
    H = num_heads
    D = C // H
    scale = D ** (-0.5)
    qkv = x.reshape(B * T * N, C) @ params["qkv_w"] + params["qkv_b"]
    qkv = qkv.reshape(B, T, N, 3, H, D).transpose(3, 0, 4, 1, 2, 5)
    q, k, v = qkv[0], qkv[1], qkv[2]
    attn = jnp.einsum("bhtnd,bhtmd->bhtnm", q, k) * scale
    rpi = relative_position_index(window_size)
    bias = params["rel_bias_table"][rpi.reshape(-1)].reshape(N, N, H).transpose(2, 0, 1)
    attn = attn + bias[None, :, None, :, :]
    attn = jax.nn.softmax(attn, axis=-1)
    out = jnp.einsum("bhtnm,bhtmd->bhtnd", attn, v)
    out = out.transpose(0, 2, 3, 4, 1).reshape(B, T, N, C)
    out = out.reshape(B * T * N, C) @ params["proj_w"] + params["proj_b"]
    return out.reshape(B, T, N, C)


if __name__ == "__main__":
    # small shapes consistent with the module: N must equal Wh*Ww
    B, T = 2, 4
    window_size = (4, 4)
    N = window_size[0] * window_size[1]   # 16
    C = 32
    num_heads = 4

    key = jax.random.PRNGKey(0)
    kp, kx = jax.random.split(key)
    params = init_params(kp, C, num_heads, window_size, qkv_bias=False)
    x = jax.random.normal(kx, (B, T, N, C), dtype=jnp.float32)

    ref = reference_forward(x, params, num_heads, window_size)

    # Fast (default) path: bf16 MXU operands, f32 accumulation, f32 softmax.
    prep_bf16 = prepare_params(params, C, num_heads, window_size,
                               mxu_dtype=jnp.bfloat16)
    out_bf16 = jax.block_until_ready(attention_forward(x, prep_bf16, num_heads))
    assert out_bf16.shape == (B, T, N, C)
    rel = float(jnp.linalg.norm(out_bf16 - ref) / jnp.linalg.norm(ref))
    assert rel < 2e-2, f"bf16 path relative error too large: {rel}"

    # Bit-faithful path: f32 MXU operands, tight elementwise check vs reference.
    prep_f32 = prepare_params(params, C, num_heads, window_size,
                              mxu_dtype=jnp.float32)
    out_f32 = jax.block_until_ready(attention_forward(x, prep_f32, num_heads))
    assert jnp.allclose(out_f32, ref, atol=2e-3, rtol=2e-3), "f32 path mismatch"

    print("KERNEL_OK")
</pallas_src>

<mosaic_0001>
module attributes {stable_mosaic.version = 11 : i64} {
  func.func @_fused_attention_kernel(%arg0: i32, %arg1: i32, %arg2: memref<1x64x32xf32, #tpu.memory_space<vmem>>, %arg3: memref<32x96xbf16, #tpu.memory_space<vmem>>, %arg4: memref<1x96xf32, #tpu.memory_space<vmem>>, %arg5: memref<4x16x16xf32, #tpu.memory_space<vmem>>, %arg6: memref<4x8x32xbf16, #tpu.memory_space<vmem>>, %arg7: memref<1x32xf32, #tpu.memory_space<vmem>>, %arg8: memref<1x64x32xf32, #tpu.memory_space<vmem>>) attributes {dimension_semantics = [#tpu.dimension_semantics<parallel>, #tpu.dimension_semantics<parallel>], iteration_bounds = array<i64: 2, 1>, scalar_prefetch = 0 : i64, scratch_operands = 0 : i64, tpu.core_type = #tpu.core_type<tc>, window_params = [{transform_indices = @transform_0, window_bounds = array<i64: 1, 64, 32>}, {pipeline_mode = #tpu.pipeline_mode<synchronous>, transform_indices = @transform_1, window_bounds = array<i64: 32, 96>}, {pipeline_mode = #tpu.pipeline_mode<synchronous>, transform_indices = @transform_2, window_bounds = array<i64: 1, 96>}, {pipeline_mode = #tpu.pipeline_mode<synchronous>, transform_indices = @transform_3, window_bounds = array<i64: 4, 16, 16>}, {pipeline_mode = #tpu.pipeline_mode<synchronous>, transform_indices = @transform_4, window_bounds = array<i64: 4, 8, 32>}, {pipeline_mode = #tpu.pipeline_mode<synchronous>, transform_indices = @transform_5, window_bounds = array<i64: 1, 32>}, {transform_indices = @transform_6, window_bounds = array<i64: 1, 64, 32>}]} {
    %c0 = arith.constant 0 : index
    %c0_0 = arith.constant 0 : index
    %c0_1 = arith.constant 0 : index
    %0 = vector.load %arg2[%c0, %c0_0, %c0_1] : memref<1x64x32xf32, #tpu.memory_space<vmem>>, vector<1x64x32xf32>
    %1 = vector.shape_cast %0 : vector<1x64x32xf32> to vector<64x32xf32>
    %2 = arith.truncf %1 : vector<64x32xf32> to vector<64x32xbf16>
    %c0_2 = arith.constant 0 : index
    %c0_3 = arith.constant 0 : index
    %3 = vector.load %arg3[%c0_2, %c0_3] : memref<32x96xbf16, #tpu.memory_space<vmem>>, vector<32x96xbf16>
    %cst = arith.constant dense<0.000000e+00> : vector<64x96xf32>
    %4 = tpu.matmul %2, %3, %cst {dimension_numbers = #tpu.dot_dimension_numbers<[1], [0], [0], [1], [0, 0, 1, 1], [], []>} : vector<64x32xbf16>, vector<32x96xbf16>, vector<64x96xf32> -> vector<64x96xf32>
    %c0_4 = arith.constant 0 : index
    %c0_5 = arith.constant 0 : index
    %5 = vector.load %arg4[%c0_4, %c0_5] : memref<1x96xf32, #tpu.memory_space<vmem>>, vector<1x96xf32>
    %6 = vector.broadcast %5 : vector<1x96xf32> to vector<64x96xf32>
    %7 = arith.addf %4, %6 : vector<64x96xf32>
    %8 = vector.shape_cast %7 : vector<64x96xf32> to vector<4x16x96xf32>
    %9 = vector.extract_strided_slice %8 {offsets = [0, 0, 0], sizes = [4, 16, 8], strides = [1, 1, 1]} : vector<4x16x96xf32> to vector<4x16x8xf32>
    %10 = vector.extract_strided_slice %8 {offsets = [0, 0, 8], sizes = [4, 16, 8], strides = [1, 1, 1]} : vector<4x16x96xf32> to vector<4x16x8xf32>
    %11 = vector.extract_strided_slice %8 {offsets = [0, 0, 16], sizes = [4, 16, 8], strides = [1, 1, 1]} : vector<4x16x96xf32> to vector<4x16x8xf32>
    %12 = vector.extract_strided_slice %8 {offsets = [0, 0, 24], sizes = [4, 16, 8], strides = [1, 1, 1]} : vector<4x16x96xf32> to vector<4x16x8xf32>
    %13 = vector.shape_cast %9 : vector<4x16x8xf32> to vector<1x4x16x8xf32>
    %14 = vector.shape_cast %10 : vector<4x16x8xf32> to vector<1x4x16x8xf32>
    %15 = vector.shape_cast %11 : vector<4x16x8xf32> to vector<1x4x16x8xf32>
    %16 = vector.shape_cast %12 : vector<4x16x8xf32> to vector<1x4x16x8xf32>
    %17 = tpu.concatenate %13, %14, %15, %16 in 0 : vector<1x4x16x8xf32>, vector<1x4x16x8xf32>, vector<1x4x16x8xf32>, vector<1x4x16x8xf32> -> vector<4x4x16x8xf32>
    %18 = vector.extract_strided_slice %8 {offsets = [0, 0, 32], sizes = [4, 16, 8], strides = [1, 1, 1]} : vector<4x16x96xf32> to vector<4x16x8xf32>
    %19 = vector.extract_strided_slice %8 {offsets = [0, 0, 40], sizes = [4, 16, 8], strides = [1, 1, 1]} : vector<4x16x96xf32> to vector<4x16x8xf32>
    %20 = vector.extract_strided_slice %8 {offsets = [0, 0, 48], sizes = [4, 16, 8], strides = [1, 1, 1]} : vector<4x16x96xf32> to vector<4x16x8xf32>
    %21 = vector.extract_strided_slice %8 {offsets = [0, 0, 56], sizes = [4, 16, 8], strides = [1, 1, 1]} : vector<4x16x96xf32> to vector<4x16x8xf32>
    %22 = vector.shape_cast %18 : vector<4x16x8xf32> to vector<1x4x16x8xf32>
    %23 = vector.shape_cast %19 : vector<4x16x8xf32> to vector<1x4x16x8xf32>
    %24 = vector.shape_cast %20 : vector<4x16x8xf32> to vector<1x4x16x8xf32>
    %25 = vector.shape_cast %21 : vector<4x16x8xf32> to vector<1x4x16x8xf32>
    %26 = tpu.concatenate %22, %23, %24, %25 in 0 : vector<1x4x16x8xf32>, vector<1x4x16x8xf32>, vector<1x4x16x8xf32>, vector<1x4x16x8xf32> -> vector<4x4x16x8xf32>
    %27 = vector.extract_strided_slice %8 {offsets = [0, 0, 64], sizes = [4, 16, 8], strides = [1, 1, 1]} : vector<4x16x96xf32> to vector<4x16x8xf32>
    %28 = vector.extract_strided_slice %8 {offsets = [0, 0, 72], sizes = [4, 16, 8], strides = [1, 1, 1]} : vector<4x16x96xf32> to vector<4x16x8xf32>
    %29 = vector.extract_strided_slice %8 {offsets = [0, 0, 80], sizes = [4, 16, 8], strides = [1, 1, 1]} : vector<4x16x96xf32> to vector<4x16x8xf32>
    %30 = vector.extract_strided_slice %8 {offsets = [0, 0, 88], sizes = [4, 16, 8], strides = [1, 1, 1]} : vector<4x16x96xf32> to vector<4x16x8xf32>
    %31 = vector.shape_cast %27 : vector<4x16x8xf32> to vector<1x4x16x8xf32>
    %32 = vector.shape_cast %28 : vector<4x16x8xf32> to vector<1x4x16x8xf32>
    %33 = vector.shape_cast %29 : vector<4x16x8xf32> to vector<1x4x16x8xf32>
    %34 = vector.shape_cast %30 : vector<4x16x8xf32> to vector<1x4x16x8xf32>
    %35 = tpu.concatenate %31, %32, %33, %34 in 0 : vector<1x4x16x8xf32>, vector<1x4x16x8xf32>, vector<1x4x16x8xf32>, vector<1x4x16x8xf32> -> vector<4x4x16x8xf32>
    %36 = vector.shape_cast %17 : vector<4x4x16x8xf32> to vector<16x16x8xf32>
    %37 = arith.truncf %36 : vector<16x16x8xf32> to vector<16x16x8xbf16>
    %38 = vector.shape_cast %26 : vector<4x4x16x8xf32> to vector<16x16x8xf32>
    %39 = arith.truncf %38 : vector<16x16x8xf32> to vector<16x16x8xbf16>
    %40 = vector.shape_cast %35 : vector<4x4x16x8xf32> to vector<16x16x8xf32>
    %41 = arith.truncf %40 : vector<16x16x8xf32> to vector<16x16x8xbf16>
    %cst_6 = arith.constant dense<0.000000e+00> : vector<16x16x16xf32>
    %42 = tpu.matmul %37, %39, %cst_6 {dimension_numbers = #tpu.dot_dimension_numbers<[2], [2], [1], [1], [0, 0, 0, 1, 1, 1], [0], [0]>} : vector<16x16x8xbf16>, vector<16x16x8xbf16>, vector<16x16x16xf32> -> vector<16x16x16xf32>
    %43 = vector.shape_cast %42 : vector<16x16x16xf32> to vector<4x4x16x16xf32>
    %c0_7 = arith.constant 0 : index
    %c0_8 = arith.constant 0 : index
    %c0_9 = arith.constant 0 : index
    %44 = vector.load %arg5[%c0_7, %c0_8, %c0_9] : memref<4x16x16xf32, #tpu.memory_space<vmem>>, vector<4x16x16xf32>
    %45 = vector.shape_cast %44 : vector<4x16x16xf32> to vector<4x1x16x16xf32>
    %46 = vector.broadcast %45 : vector<4x1x16x16xf32> to vector<4x4x16x16xf32>
    %47 = arith.addf %43, %46 : vector<4x4x16x16xf32>
    %cst_10 = arith.constant dense<0xFF800000> : vector<4x4x16xf32>
    %48 = vector.multi_reduction <maximumf>, %47, %cst_10 [3] : vector<4x4x16x16xf32> to vector<4x4x16xf32>
    %49 = vector.shape_cast %48 : vector<4x4x16xf32> to vector<4x4x16x1xf32>
    %50 = vector.broadcast %49 : vector<4x4x16x1xf32> to vector<4x4x16x16xf32>
    %51 = arith.subf %47, %50 : vector<4x4x16x16xf32>
    %52 = math.exp %51 : vector<4x4x16x16xf32>
    %cst_11 = arith.constant dense<0.000000e+00> : vector<4x4x16xf32>
    %53 = vector.multi_reduction <add>, %52, %cst_11 [3] : vector<4x4x16x16xf32> to vector<4x4x16xf32>
    %54 = vector.shape_cast %53 : vector<4x4x16xf32> to vector<4x4x16x1xf32>
    %55 = tpu.reciprocal %54 : vector<4x4x16x1xf32> -> vector<4x4x16x1xf32>
    %56 = vector.broadcast %55 : vector<4x4x16x1xf32> to vector<4x4x16x16xf32>
    %57 = arith.mulf %52, %56 : vector<4x4x16x16xf32>
    %58 = vector.shape_cast %57 : vector<4x4x16x16xf32> to vector<16x16x16xf32>
    %59 = arith.truncf %58 : vector<16x16x16xf32> to vector<16x16x16xbf16>
    %cst_12 = arith.constant dense<0.000000e+00> : vector<16x16x8xf32>
    %60 = tpu.matmul %59, %41, %cst_12 {dimension_numbers = #tpu.dot_dimension_numbers<[2], [1], [1], [2], [0, 0, 0, 1, 1, 2], [0], [0]>} : vector<16x16x16xbf16>, vector<16x16x8xbf16>, vector<16x16x8xf32> -> vector<16x16x8xf32>
    %61 = vector.shape_cast %60 : vector<16x16x8xf32> to vector<4x64x8xf32>
    %62 = arith.truncf %61 : vector<4x64x8xf32> to vector<4x64x8xbf16>
    %63 = vector.extract_strided_slice %62 {offsets = [0, 0, 0], sizes = [1, 64, 8], strides = [1, 1, 1]} : vector<4x64x8xbf16> to vector<1x64x8xbf16>
    %64 = vector.shape_cast %63 : vector<1x64x8xbf16> to vector<64x8xbf16>
    %c0_13 = arith.constant 0 : index
    %c0_14 = arith.constant 0 : index
    %c0_15 = arith.constant 0 : index
    %65 = vector.load %arg6[%c0_13, %c0_14, %c0_15] : memref<4x8x32xbf16, #tpu.memory_space<vmem>>, vector<1x8x32xbf16>
    %66 = vector.shape_cast %65 : vector<1x8x32xbf16> to vector<8x32xbf16>
    %cst_16 = arith.constant dense<0.000000e+00> : vector<64x32xf32>
    %67 = tpu.matmul %64, %66, %cst_16 {dimension_numbers = #tpu.dot_dimension_numbers<[1], [0], [0], [1], [0, 0, 1, 1], [], []>} : vector<64x8xbf16>, vector<8x32xbf16>, vector<64x32xf32> -> vector<64x32xf32>
    %68 = vector.extract_strided_slice %62 {offsets = [1, 0, 0], sizes = [1, 64, 8], strides = [1, 1, 1]} : vector<4x64x8xbf16> to vector<1x64x8xbf16>
    %69 = vector.shape_cast %68 : vector<1x64x8xbf16> to vector<64x8xbf16>
    %c1 = arith.constant 1 : index
    %c0_17 = arith.constant 0 : index
    %c0_18 = arith.constant 0 : index
    %70 = vector.load %arg6[%c1, %c0_17, %c0_18] : memref<4x8x32xbf16, #tpu.memory_space<vmem>>, vector<1x8x32xbf16>
    %71 = vector.shape_cast %70 : vector<1x8x32xbf16> to vector<8x32xbf16>
    %cst_19 = arith.constant dense<0.000000e+00> : vector<64x32xf32>
    %72 = tpu.matmul %69, %71, %cst_19 {dimension_numbers = #tpu.dot_dimension_numbers<[1], [0], [0], [1], [0, 0, 1, 1], [], []>} : vector<64x8xbf16>, vector<8x32xbf16>, vector<64x32xf32> -> vector<64x32xf32>
    %73 = arith.addf %67, %72 : vector<64x32xf32>
    %74 = vector.extract_strided_slice %62 {offsets = [2, 0, 0], sizes = [1, 64, 8], strides = [1, 1, 1]} : vector<4x64x8xbf16> to vector<1x64x8xbf16>
    %75 = vector.shape_cast %74 : vector<1x64x8xbf16> to vector<64x8xbf16>
    %c2 = arith.constant 2 : index
    %c0_20 = arith.constant 0 : index
    %c0_21 = arith.constant 0 : index
    %76 = vector.load %arg6[%c2, %c0_20, %c0_21] : memref<4x8x32xbf16, #tpu.memory_space<vmem>>, vector<1x8x32xbf16>
    %77 = vector.shape_cast %76 : vector<1x8x32xbf16> to vector<8x32xbf16>
    %cst_22 = arith.constant dense<0.000000e+00> : vector<64x32xf32>
    %78 = tpu.matmul %75, %77, %cst_22 {dimension_numbers = #tpu.dot_dimension_numbers<[1], [0], [0], [1], [0, 0, 1, 1], [], []>} : vector<64x8xbf16>, vector<8x32xbf16>, vector<64x32xf32> -> vector<64x32xf32>
    %79 = arith.addf %73, %78 : vector<64x32xf32>
    %80 = vector.extract_strided_slice %62 {offsets = [3, 0, 0], sizes = [1, 64, 8], strides = [1, 1, 1]} : vector<4x64x8xbf16> to vector<1x64x8xbf16>
    %81 = vector.shape_cast %80 : vector<1x64x8xbf16> to vector<64x8xbf16>
    %c3 = arith.constant 3 : index
    %c0_23 = arith.constant 0 : index
    %c0_24 = arith.constant 0 : index
    %82 = vector.load %arg6[%c3, %c0_23, %c0_24] : memref<4x8x32xbf16, #tpu.memory_space<vmem>>, vector<1x8x32xbf16>
    %83 = vector.shape_cast %82 : vector<1x8x32xbf16> to vector<8x32xbf16>
    %cst_25 = arith.constant dense<0.000000e+00> : vector<64x32xf32>
    %84 = tpu.matmul %81, %83, %cst_25 {dimension_numbers = #tpu.dot_dimension_numbers<[1], [0], [0], [1], [0, 0, 1, 1], [], []>} : vector<64x8xbf16>, vector<8x32xbf16>, vector<64x32xf32> -> vector<64x32xf32>
    %85 = arith.addf %79, %84 : vector<64x32xf32>
    %c0_26 = arith.constant 0 : index
    %c0_27 = arith.constant 0 : index
    %86 = vector.load %arg7[%c0_26, %c0_27] : memref<1x32xf32, #tpu.memory_space<vmem>>, vector<1x32xf32>
    %87 = vector.broadcast %86 : vector<1x32xf32> to vector<64x32xf32>
    %88 = arith.addf %85, %87 : vector<64x32xf32>
    %c0_28 = arith.constant 0 : index
    %c0_29 = arith.constant 0 : index
    %c0_30 = arith.constant 0 : index
    %89 = vector.load %arg8[%c0_28, %c0_29, %c0_30] : memref<1x64x32xf32, #tpu.memory_space<vmem>>, vector<1x64x32xf32>
    %90 = vector.shape_cast %89 : vector<1x64x32xf32> to vector<64x32xf32>
    %91 = vector.shape_cast %88 : vector<64x32xf32> to vector<1x64x32xf32>
    tpu.vector_store %arg8[%c0_28, %c0_29, %c0_30], %91 {strides = array<i32>} : memref<1x64x32xf32, #tpu.memory_space<vmem>>, vector<1x64x32xf32>,
    return
  }
  func.func @transform_0(%arg0: i32, %arg1: i32) -> (i32, i32, i32) {
    %c0_i32 = arith.constant 0 : i32
    %c0_i32_0 = arith.constant 0 : i32
    return %arg0, %arg1, %c0_i32 : i32, i32, i32
  }
  func.func @transform_1(%arg0: i32, %arg1: i32) -> (i32, i32) {
    %c0_i32 = arith.constant 0 : i32
    %c0_i32_0 = arith.constant 0 : i32
    %c0_i32_1 = arith.constant 0 : i32
    return %c0_i32, %c0_i32_0 : i32, i32
  }
  func.func @transform_2(%arg0: i32, %arg1: i32) -> (i32, i32) {
    %c0_i32 = arith.constant 0 : i32
    %c0_i32_0 = arith.constant 0 : i32
    %c0_i32_1 = arith.constant 0 : i32
    return %c0_i32, %c0_i32_0 : i32, i32
  }
  func.func @transform_3(%arg0: i32, %arg1: i32) -> (i32, i32, i32) {
    %c0_i32 = arith.constant 0 : i32
    %c0_i32_0 = arith.constant 0 : i32
    %c0_i32_1 = arith.constant 0 : i32
    %c0_i32_2 = arith.constant 0 : i32
    return %c0_i32, %c0_i32_0, %c0_i32_1 : i32, i32, i32
  }
  func.func @transform_4(%arg0: i32, %arg1: i32) -> (i32, i32, i32) {
    %c0_i32 = arith.constant 0 : i32
    %c0_i32_0 = arith.constant 0 : i32
    %c0_i32_1 = arith.constant 0 : i32
    %c0_i32_2 = arith.constant 0 : i32
    return %c0_i32, %c0_i32_0, %c0_i32_1 : i32, i32, i32
  }
  func.func @transform_5(%arg0: i32, %arg1: i32) -> (i32, i32) {
    %c0_i32 = arith.constant 0 : i32
    %c0_i32_0 = arith.constant 0 : i32
    %c0_i32_1 = arith.constant 0 : i32
    return %c0_i32, %c0_i32_0 : i32, i32
  }
  func.func @transform_6(%arg0: i32, %arg1: i32) -> (i32, i32, i32) {
    %c0_i32 = arith.constant 0 : i32
    %c0_i32_0 = arith.constant 0 : i32
    return %arg0, %arg1, %c0_i32 : i32, i32, i32
  }
}

</mosaic_0001>

<llo_original>
// kernel: tpu_custom_call.1
$region0: #{tpu_custom_call.1}
  #allocation0 [shape = 'u32[]', space=smem, size = 0x4, offset = 0x4, fixed_abs, tag = 'smem constant byte address 0x4 - core index']
  #allocation1 [shape = 'u32[144,128]{1,0:T(1,128)}', space=vmem, size = 0x12000, scoped, tag = 'internal scratch']
  %s0 = inlined_call_operand.vmem [shape: f32[2,64,32], index: 0, kind: input, shape index: {}]
  %s1 = inlined_call_operand.vmem [shape: bf16[32,96], index: 1, kind: input, shape index: {}]
  %s2 = inlined_call_operand.vmem [shape: f32[1,96], index: 2, kind: input, shape index: {}]
  %s3 = inlined_call_operand.vmem [shape: f32[4,16,16], index: 3, kind: input, shape index: {}]
  %s4 = inlined_call_operand.vmem [shape: bf16[4,8,32], index: 4, kind: input, shape index: {}]
  %s5 = inlined_call_operand.vmem [shape: f32[1,32], index: 5, kind: input, shape index: {}]
  %s6 = inlined_call_operand.vmem [shape: f32[2,64,32], index: 6, kind: output, shape index: {}]
  %s7 = sld [smem:[#allocation0]]
  $region57: #{tpu_custom_call.1} parent=0
    _
  %s9 = ssub.s32 1, %s7
  %s10 = scalar_select 0, %s9, %s7
  loop: start=0, step=1, limit=4
  $region2: #{tpu_custom_call.1} parent=0 // loop_pre_header
    _
  $region3: #{tpu_custom_call.1} parent=0 // loop_header
    %s12 = sphi 0, %s16
    %p13 = scmp.ge.s32.totalorder %s12, 4
    %s19 = sphi 0, %s31
    %s20 = sphi 0, %s27
    %s21 = sphi 0, %s19
    %s22 = sphi 0, %s20
    %s23 = sphi 0, %s21
    %s24 = sphi 0, %s22
    %s36 = sphi 0, %s38
    %s39 = sphi 0, %s36
    %s40 = sphi 0, %s39
    %s56 = sphi 0, %s40
    %s60 = sphi 0, %s60
    %s62 = sphi 0, %s60
    %s63 = sphi 0, %s62
    %s77 = sphi 0, %s63
    %s81 = sphi 0, %s81
    %s83 = sphi 0, %s81
    %s84 = sphi 0, %s83
    %s98 = sphi 0, %s84
    %s102 = sphi 0, %s102
    %s104 = sphi 0, %s102
    %s105 = sphi 0, %s104
    %s119 = sphi 0, %s105
    %s123 = sphi 0, %s123
    %s125 = sphi 0, %s123
    %s126 = sphi 0, %s125
    %s140 = sphi 0, %s126
    %s144 = sphi 0, %s144
    %s146 = sphi 0, %s144
    %s147 = sphi 0, %s146
    %s161 = sphi 0, %s147
    %s169 = sphi 0, %s171
    %s172 = sphi 0, %s169
    %s173 = sphi 0, %s172
    %s189 = sphi 0, %s173
  $region4: #{tpu_custom_call.1} parent=0 // loop_header_branch
    %15 = sbr.rel (%p13) target = $region8
  $region5: #{tpu_custom_call.1} parent=0 // loop_body
    %s17 = ssub.s32 %s12, 1
    %s18 = ssub.s32 %s12, 2
    %s25 = sadd.s32 1, %s20
    %p26 = scmp.ge.s32.totalorder %s25, 1
    %s27 = scalar_select %p26, 0, %s25
    %s28 = sadd.s32 1, %s19
    %s29 = scalar_select %p26, %s28, %s19
    %p30 = scmp.ge.s32.totalorder %s29, 2
    %s31 = scalar_select %p30, 0, %s29
    %s32 = ssub.s32 %s19, %s31
    %s33 = ssub.s32 %s20, %s27
    %s34 = sor.u32 %s32, %s33
    %p35 = scmp.eq.s32.totalorder %s34, 0
    %s37 = sadd.s32 %s36, 1
    %s38 = scalar_select %p35, %s36, %s37
    %p41 = pneg %p35
    %p42 = scmp.eq.s32.totalorder %s12, 1
    %p43 = por %p41, %p42
    %p44 = scmp.ne.s32.totalorder %s36, %s39
    %p45 = scmp.eq.s32.totalorder %s12, 0
    %p46 = por %p44, %p45
    %p47 = scmp.ne.s32.totalorder %s36, %s39
    %p48 = scmp.eq.s32.totalorder %s17, 1
    %p49 = por %p47, %p48
    %p50 = scmp.ne.s32.totalorder %s39, %s40
    %p51 = scmp.eq.s32.totalorder %s17, 0
    %p52 = por %p50, %p51
    %p53 = scmp.ne.s32.totalorder %s39, %s40
    %p54 = scmp.eq.s32.totalorder %s18, 1
    %p55 = por %p53, %p54
    %p57 = scmp.ne.s32.totalorder %s40, %s56
    %p58 = scmp.eq.s32.totalorder %s18, 0
    %p59 = por %p57, %p58
    %s61 = sadd.s32 %s60, 1
    %p64 = scmp.eq.s32.totalorder %s12, 1
    %p65 = scmp.ne.s32.totalorder %s60, %s62
    %p66 = scmp.eq.s32.totalorder %s12, 0
    %p67 = por %p65, %p66
    %p68 = scmp.ne.s32.totalorder %s60, %s62
    %p69 = scmp.eq.s32.totalorder %s17, 1
    %p70 = por %p68, %p69
    %p71 = scmp.ne.s32.totalorder %s62, %s63
    %p72 = scmp.eq.s32.totalorder %s17, 0
    %p73 = por %p71, %p72
    %p74 = scmp.ne.s32.totalorder %s62, %s63
    %p75 = scmp.eq.s32.totalorder %s18, 1
    %p76 = por %p74, %p75
    %p78 = scmp.ne.s32.totalorder %s63, %s77
    %p79 = scmp.eq.s32.totalorder %s18, 0
    %p80 = por %p78, %p79
    %s82 = sadd.s32 %s81, 1
    %p85 = scmp.eq.s32.totalorder %s12, 1
    %p86 = scmp.ne.s32.totalorder %s81, %s83
    %p87 = scmp.eq.s32.totalorder %s12, 0
    %p88 = por %p86, %p87
    %p89 = scmp.ne.s32.totalorder %s81, %s83
    %p90 = scmp.eq.s32.totalorder %s17, 1
    %p91 = por %p89, %p90
    %p92 = scmp.ne.s32.totalorder %s83, %s84
    %p93 = scmp.eq.s32.totalorder %s17, 0
    %p94 = por %p92, %p93
    %p95 = scmp.ne.s32.totalorder %s83, %s84
    %p96 = scmp.eq.s32.totalorder %s18, 1
    %p97 = por %p95, %p96
    %p99 = scmp.ne.s32.totalorder %s84, %s98
    %p100 = scmp.eq.s32.totalorder %s18, 0
    %p101 = por %p99, %p100
    %s103 = sadd.s32 %s102, 1
    %p106 = scmp.eq.s32.totalorder %s12, 1
    %p107 = scmp.ne.s32.totalorder %s102, %s104
    %p108 = scmp.eq.s32.totalorder %s12, 0
    %p109 = por %p107, %p108
    %p110 = scmp.ne.s32.totalorder %s102, %s104
    %p111 = scmp.eq.s32.totalorder %s17, 1
    %p112 = por %p110, %p111
    %p113 = scmp.ne.s32.totalorder %s104, %s105
    %p114 = scmp.eq.s32.totalorder %s17, 0
    %p115 = por %p113, %p114
    %p116 = scmp.ne.s32.totalorder %s104, %s105
    %p117 = scmp.eq.s32.totalorder %s18, 1
    %p118 = por %p116, %p117
    %p120 = scmp.ne.s32.totalorder %s105, %s119
    %p121 = scmp.eq.s32.totalorder %s18, 0
    %p122 = por %p120, %p121
    %s124 = sadd.s32 %s123, 1
    %p127 = scmp.eq.s32.totalorder %s12, 1
    %p128 = scmp.ne.s32.totalorder %s123, %s125
    %p129 = scmp.eq.s32.totalorder %s12, 0
    %p130 = por %p128, %p129
    %p131 = scmp.ne.s32.totalorder %s123, %s125
    %p132 = scmp.eq.s32.totalorder %s17, 1
    %p133 = por %p131, %p132
    %p134 = scmp.ne.s32.totalorder %s125, %s126
    %p135 = scmp.eq.s32.totalorder %s17, 0
    %p136 = por %p134, %p135
    %p137 = scmp.ne.s32.totalorder %s125, %s126
    %p138 = scmp.eq.s32.totalorder %s18, 1
    %p139 = por %p137, %p138
    %p141 = scmp.ne.s32.totalorder %s126, %s140
    %p142 = scmp.eq.s32.totalorder %s18, 0
    %p143 = por %p141, %p142
    %s145 = sadd.s32 %s144, 1
    %p148 = scmp.eq.s32.totalorder %s12, 1
    %p149 = scmp.ne.s32.totalorder %s144, %s146
    %p150 = scmp.eq.s32.totalorder %s12, 0
    %p151 = por %p149, %p150
    %p152 = scmp.ne.s32.totalorder %s144, %s146
    %p153 = scmp.eq.s32.totalorder %s17, 1
    %p154 = por %p152, %p153
    %p155 = scmp.ne.s32.totalorder %s146, %s147
    %p156 = scmp.eq.s32.totalorder %s17, 0
    %p157 = por %p155, %p156
    %p158 = scmp.ne.s32.totalorder %s146, %s147
    %p159 = scmp.eq.s32.totalorder %s18, 1
    %p160 = por %p158, %p159
    %p162 = scmp.ne.s32.totalorder %s147, %s161
    %p163 = scmp.eq.s32.totalorder %s18, 0
    %p164 = por %p162, %p163
    %s165 = ssub.s32 %s19, %s31
    %s166 = ssub.s32 %s20, %s27
    %s167 = sor.u32 %s165, %s166
    %p168 = scmp.eq.s32.totalorder %s167, 0
    %s170 = sadd.s32 %s169, 1
    %s171 = scalar_select %p168, %s169, %s170
    %p174 = pneg %p168
    %p175 = scmp.eq.s32.totalorder %s12, 1
    %p176 = por %p174, %p175
    %p177 = scmp.ne.s32.totalorder %s169, %s172
    %p178 = scmp.eq.s32.totalorder %s12, 0
    %p179 = por %p177, %p178
    %p180 = scmp.ne.s32.totalorder %s169, %s172
    %p181 = scmp.eq.s32.totalorder %s17, 1
    %p182 = por %p180, %p181
    %p183 = scmp.ne.s32.totalorder %s172, %s173
    %p184 = scmp.eq.s32.totalorder %s17, 0
    %p185 = por %p183, %p184
    %p186 = scmp.ne.s32.totalorder %s172, %s173
    %p187 = scmp.eq.s32.totalorder %s18, 1
    %p188 = por %p186, %p187
    %p190 = scmp.ne.s32.totalorder %s173, %s189
    %p191 = scmp.eq.s32.totalorder %s18, 0
    %p192 = por %p190, %p191
    %p193 = scmp.le.s32.totalorder 1, %s12
    %p194 = scmp.lt.s32.totalorder %s12, 3
    %p195 = pnand %p193, %p194
    %p196 = pneg %p195
    // Predicated region
    $region9: #{tpu_custom_call.1} parent=5 // pred_check
      _
    $region10: #{tpu_custom_call.1} parent=5 // pred_check_branch
      %198 = sbr.rel (%p195) target = $region12
    $region11: #{tpu_custom_call.1} parent=5 // pred_region
      %s199 = ssub.s32 %s12, 1
      // Predicated region
      $region13: #{tpu_custom_call.1} parent=11 // pred_check
        %p200 = pneg %p73
      $region14: #{tpu_custom_call.1} parent=11 // pred_check_branch
        %202 = sbr.rel (%p200) target = $region16
      $region15: #{tpu_custom_call.1} parent=11 // pred_region
        _
      $region16: #{tpu_custom_call.1} parent=11 // pred_fallthru
        _
      // Predicated region
      $region17: #{tpu_custom_call.1} parent=11 // pred_check
        %p203 = pneg %p94
      $region18: #{tpu_custom_call.1} parent=11 // pred_check_branch
        %205 = sbr.rel (%p203) target = $region20
      $region19: #{tpu_custom_call.1} parent=11 // pred_region
        _
      $region20: #{tpu_custom_call.1} parent=11 // pred_fallthru
        _
      // Predicated region
      $region21: #{tpu_custom_call.1} parent=11 // pred_check
        %p206 = pneg %p115
      $region22: #{tpu_custom_call.1} parent=11 // pred_check_branch
        %208 = sbr.rel (%p206) target = $region24
      $region23: #{tpu_custom_call.1} parent=11 // pred_region
        _
      $region24: #{tpu_custom_call.1} parent=11 // pred_fallthru
        _
      // Predicated region
      $region25: #{tpu_custom_call.1} parent=11 // pred_check
        %p209 = pneg %p136
      $region26: #{tpu_custom_call.1} parent=11 // pred_check_branch
        %211 = sbr.rel (%p209) target = $region28
      $region27: #{tpu_custom_call.1} parent=11 // pred_region
        _
      $region28: #{tpu_custom_call.1} parent=11 // pred_fallthru
        _
      // Predicated region
      $region29: #{tpu_custom_call.1} parent=11 // pred_check
        %p212 = pneg %p157
      $region30: #{tpu_custom_call.1} parent=11 // pred_check_branch
        %214 = sbr.rel (%p212) target = $region32
      $region31: #{tpu_custom_call.1} parent=11 // pred_region
        _
      $region32: #{tpu_custom_call.1} parent=11 // pred_fallthru
        _
    $region12: #{tpu_custom_call.1} parent=5 // pred_fallthru
      _
    %p215 = scmp.lt.s32.totalorder %s12, 2
    // Predicated region
    $region33: #{tpu_custom_call.1} parent=5 // pred_check
      %p216 = pneg %p215
    $region34: #{tpu_custom_call.1} parent=5 // pred_check_branch
      %218 = sbr.rel (%p216) target = $region36
    $region35: #{tpu_custom_call.1} parent=5 // pred_region
      // Predicated region
      $region37: #{tpu_custom_call.1} parent=35 // pred_check
        %p219 = pneg %p46
      $region38: #{tpu_custom_call.1} parent=35 // pred_check_branch
        %221 = sbr.rel (%p219) target = $region40
      $region39: #{tpu_custom_call.1} parent=35 // pred_region
        %s222 = smul.u32 8, %s20
        %p223 = scmp.lt.s32.totalorder %s19, 1
        %s224 = scalar_select %p223, %s19, 1
        %p225 = scmp.lt.s32.totalorder %s222, 7
        %s226 = scalar_select %p225, %s222, 7
        %s227 = smul.addr %s224, 8
        %s228 = sadd.s32 %s226, %s227
        %s229 = smul.addr %s228, 8
        %s230 = scalar_lea.vmem %s0, %s229
        %s231 = smul.u32 8, %s20
      $region40: #{tpu_custom_call.1} parent=35 // pred_fallthru
        _
    $region36: #{tpu_custom_call.1} parent=5 // pred_fallthru
      _
    %p232 = scmp.le.s32.totalorder 1, %s12
    %p233 = scmp.lt.s32.totalorder %s12, 3
    %p234 = pnand %p232, %p233
    %p235 = pneg %p234
    // Predicated region
    $region41: #{tpu_custom_call.1} parent=5 // pred_check
      _
    $region42: #{tpu_custom_call.1} parent=5 // pred_check_branch
      %237 = sbr.rel (%p234) target = $region44
    $region43: #{tpu_custom_call.1} parent=5 // pred_region
      %s238 = ssub.s32 %s12, 1
      %s239 = smul.u32 8, %s22
      %p240 = scmp.lt.s32.totalorder %s21, 1
      %s241 = scalar_select %p240, %s21, 1
      %p242 = scmp.lt.s32.totalorder %s239, 7
      %s243 = scalar_select %p242, %s239, 7
      %s244 = smul.addr %s241, 8
      %s245 = sadd.s32 %s243, %s244
      %s246 = smul.addr %s245, 8
      %s247 = scalar_lea.vmem %s0, %s246
      %p248 = pneg %p52
      %p249 = pneg %p49
      %p250 = pneg %p73
      %p251 = pneg %p70
      %p252 = pneg %p94
      %p253 = pneg %p91
      %p254 = pneg %p115
      %p255 = pneg %p112
      %p256 = pneg %p136
      %p257 = pneg %p133
      %p258 = pneg %p157
      %p259 = pneg %p154
      %p260 = pneg %p185
      %p261 = pneg %p182
      %s262 = smul.u32 8, %s22
      %p263 = scmp.lt.s32.totalorder %s21, 1
      %s264 = scalar_select %p263, %s21, 1
      %p265 = scmp.lt.s32.totalorder %s262, 7
      %s266 = scalar_select %p265, %s262, 7
      %s267 = smul.addr %s264, 8
      %s268 = sadd.s32 %s266, %s267
      %s269 = smul.addr %s268, 8
      %s270 = scalar_lea.vmem %s6, %s269
      %s271 = smul.u32 8, %s22
      %p272 = scmp.lt.s32.totalorder %s21, 1
      %s273 = scalar_select %p272, %s21, 1
      %p274 = scmp.lt.s32.totalorder %s271, 7
      %s275 = scalar_select %p274, %s271, 7
      %s276 = smul.addr %s273, 8
      %s277 = sadd.s32 %s275, %s276
      %s278 = smul.addr %s277, 8
      %s279 = scalar_lea.vmem %s0, %s278
      %s280 = smul.u32 8, %s22
      %s281 = smul.u32 8, %s22
      %p282 = scmp.lt.s32.totalorder %s21, 1
      %s283 = scalar_select %p282, %s21, 1
      %p284 = scmp.lt.s32.totalorder %s281, 7
      %s285 = scalar_select %p284, %s281, 7
      %s286 = smul.addr %s283, 8
      %s287 = sadd.s32 %s285, %s286
      %s288 = smul.addr %s287, 8
      %s289 = scalar_lea.vmem %s6, %s288
      %s290 = smul.u32 8, %s22
      %v292 = vld [vmem:[%s279] sm:$0xff]
      %v293 = vld [vmem:[%s279 + $0x8] sm:$0xff]
      %v294 = vld [vmem:[%s279 + $0x10] sm:$0xff]
      %v295 = vld [vmem:[%s279 + $0x18] sm:$0xff]
      %v296 = vld [vmem:[%s279 + $0x20] sm:$0xff]
      %v297 = vld [vmem:[%s279 + $0x28] sm:$0xff]
      %v298 = vld [vmem:[%s279 + $0x30] sm:$0xff]
      %v299 = vld [vmem:[%s279 + $0x38] sm:$0xff]
      %v300 = vpack.c.bf16 %v293, %v292
      %v301 = vpack.c.bf16 %v295, %v294
      %v302 = vpack.c.bf16 %v297, %v296
      %v303 = vpack.c.bf16 %v299, %v298
      %v304 = vld [vmem:[%s1] sm:$0xf]
      %v305 = vld [vmem:[%s1 + $0x4] sm:$0xf]
      %v306 = vld [vmem:[%s1 + $0x8] sm:$0xf]
      %v307 = vld [vmem:[%s1 + $0xc] sm:$0xf]
      %v308 = vld [vmem:[%s2] sm:$0x1]
      %v310 = vlaneseq
      %v311 = vshrl.u32 %v310, 7
      %v312 = vsub.s32 0, %v311
      %v313 = vrot.slane %v308, %v312
      %v319 = vunpack.c.l.b16 %v304
      %v320 = vunpack.c.l.b16 %v305
      %v321 = vunpack.c.l.b16 %v306
      %v322 = vunpack.c.l.b16 %v307
      %v323 = vpack.c.b16 %v320, %v319
      %v324 = vpack.c.b16 %v322, %v321
      %vm327 = vcmask 261120
      %v329 = vsel %vm327, %v300, 0
      %v332 = vsel %vm327, %v301, 0
      %v335 = vsel %vm327, %v302, 0
      %v338 = vsel %vm327, %v303, 0
      %340 = vmatprep.subr.bf16.mxu0 0
      %341 = vmatpush1.bf16.msra.mxu0 %v323
      %342 = vmatprep.subr.bf16.mxu0 0
      %343 = vmatpush1.bf16.msra.mxu0 %v324
      %344 = vmatprep.subr.bf16.mxu0 0
      %345 = vmatpush1.bf16.msra.mxu0 0
      %346 = vmatprep.subr.bf16.mxu0 0
      %347 = vmatpush1.bf16.msra.mxu0 0
      %348 = vmatprep.subr.bf16.mxu0 0
      %349 = vmatpush1.bf16.msra.mxu0 0
      %350 = vmatprep.subr.bf16.mxu0 0
      %351 = vmatpush1.bf16.msra.mxu0 0
      %352 = vmatprep.subr.bf16.mxu0 0
      %353 = vmatpush1.bf16.msra.mxu0 0
      %354 = vmatprep.subr.bf16.mxu0 0
      %355 = vmatpush1.bf16.msra.mxu0 0
      %356 = vmatprep.subr.bf16.mxu0 0
      %357 = vmatpush1.bf16.msra.mxu0 0
      %358 = vmatprep.subr.bf16.mxu0 0
      %359 = vmatpush1.bf16.msra.mxu0 0
      %360 = vmatprep.subr.bf16.mxu0 0
      %361 = vmatpush1.bf16.msra.mxu0 0
      %362 = vmatprep.subr.bf16.mxu0 0
      %363 = vmatpush1.bf16.msra.mxu0 0
      %364 = vmatprep.subr.bf16.mxu0 0
      %365 = vmatpush1.bf16.msra.mxu0 0
      %366 = vmatprep.subr.bf16.mxu0 0
      %367 = vmatpush1.bf16.msra.mxu0 0
      %368 = vmatprep.subr.bf16.mxu0 0
      %369 = vmatpush1.bf16.msra.mxu0 0
      %370 = vmatprep.subr.bf16.mxu0 0
      %371 = vmatpush1.bf16.msra.mxu0 0
      %372 = vmatprep.mubr.bf16.mxu0 0
      %373 = vmatmul.mubr.bf16.gmra.mrb[0].mxu0 %v329
      %v374 = vpop.f32.mrb[0].mxu0
      %v375 = vadd.f32 %v313, %v374
      %v376 = vpop.f32.mrb[0].mxu0
      %v377 = vpop.f32.mrb[0].mxu0
      %v378 = vadd.f32 %v313, %v377
      %v379 = vpop.f32.mrb[0].mxu0
      %380 = vmatprep.mubr.bf16.mxu0 0
      %381 = vmatmul.mubr.bf16.gmra.mrb[0].mxu0 %v332
      %v382 = vpop.f32.mrb[0].mxu0
      %v383 = vadd.f32 %v313, %v382
      %v384 = vpop.f32.mrb[0].mxu0
      %v385 = vpop.f32.mrb[0].mxu0
      %v386 = vadd.f32 %v313, %v385
      %v387 = vpop.f32.mrb[0].mxu0
      %388 = vmatprep.mubr.bf16.mxu0 0
      %389 = vmatmul.mubr.bf16.gmra.mrb[0].mxu0 %v335
      %v390 = vpop.f32.mrb[0].mxu0
      %v391 = vadd.f32 %v313, %v390
      %v392 = vpop.f32.mrb[0].mxu0
      %v393 = vpop.f32.mrb[0].mxu0
      %v394 = vadd.f32 %v313, %v393
      %v395 = vpop.f32.mrb[0].mxu0
      %396 = vmatprep.mubr.bf16.mxu0 0
      %397 = vmatmul.mubr.bf16.gmra.mrb[0].mxu0 %v338
      %v398 = vpop.f32.mrb[0].mxu0
      %v399 = vadd.f32 %v313, %v398
      %v400 = vpop.f32.mrb[0].mxu0
      %v401 = vpop.f32.mrb[0].mxu0
      %v402 = vadd.f32 %v313, %v401
      %v403 = vpop.f32.mrb[0].mxu0
      %404 = vdwg.mxu0
      %413 = vrot.lane.b32.xlu0 %v375, 120
      %v414 = vpop.permute.xlu0 %413
      %415 = vrot.lane.b32.xlu0 %v378, 120
      %v416 = vpop.permute.xlu0 %415
      %417 = vrot.lane.b32.xlu0 %v383, 120
      %v418 = vpop.permute.xlu0 %417
      %419 = vrot.lane.b32.xlu0 %v386, 120
      %v420 = vpop.permute.xlu0 %419
      %421 = vrot.lane.b32.xlu0 %v391, 120
      %v422 = vpop.permute.xlu0 %421
      %423 = vrot.lane.b32.xlu0 %v394, 120
      %v424 = vpop.permute.xlu0 %423
      %425 = vrot.lane.b32.xlu0 %v399, 120
      %v426 = vpop.permute.xlu0 %425
      %427 = vrot.lane.b32.xlu0 %v402, 120
      %v428 = vpop.permute.xlu0 %427
      %437 = vrot.lane.b32.xlu0 %v375, 112
      %v438 = vpop.permute.xlu0 %437
      %439 = vrot.lane.b32.xlu0 %v378, 112
      %v440 = vpop.permute.xlu0 %439
      %441 = vrot.lane.b32.xlu0 %v383, 112
      %v442 = vpop.permute.xlu0 %441
      %443 = vrot.lane.b32.xlu0 %v386, 112
      %v444 = vpop.permute.xlu0 %443
      %445 = vrot.lane.b32.xlu0 %v391, 112
      %v446 = vpop.permute.xlu0 %445
      %447 = vrot.lane.b32.xlu0 %v394, 112
      %v448 = vpop.permute.xlu0 %447
      %449 = vrot.lane.b32.xlu0 %v399, 112
      %v450 = vpop.permute.xlu0 %449
      %451 = vrot.lane.b32.xlu0 %v402, 112
      %v452 = vpop.permute.xlu0 %451
      %461 = vrot.lane.b32.xlu0 %v375, 104
      %v462 = vpop.permute.xlu0 %461
      %463 = vrot.lane.b32.xlu0 %v378, 104
      %v464 = vpop.permute.xlu0 %463
      %465 = vrot.lane.b32.xlu0 %v383, 104
      %v466 = vpop.permute.xlu0 %465
      %467 = vrot.lane.b32.xlu0 %v386, 104
      %v468 = vpop.permute.xlu0 %467
      %469 = vrot.lane.b32.xlu0 %v391, 104
      %v470 = vpop.permute.xlu0 %469
      %471 = vrot.lane.b32.xlu0 %v394, 104
      %v472 = vpop.permute.xlu0 %471
      %473 = vrot.lane.b32.xlu0 %v399, 104
      %v474 = vpop.permute.xlu0 %473
      %475 = vrot.lane.b32.xlu0 %v402, 104
      %v476 = vpop.permute.xlu0 %475
      %v485 = vpack.c.bf16 %v378, %v375
      %v486 = vpack.c.bf16 %v386, %v383
      %v487 = vpack.c.bf16 %v394, %v391
      %v488 = vpack.c.bf16 %v402, %v399
      %v489 = vpack.c.bf16 %v416, %v414
      %v490 = vpack.c.bf16 %v420, %v418
      %v491 = vpack.c.bf16 %v424, %v422
      %v492 = vpack.c.bf16 %v428, %v426
      %v493 = vpack.c.bf16 %v440, %v438
      %v494 = vpack.c.bf16 %v444, %v442
      %v495 = vpack.c.bf16 %v448, %v446
      %v496 = vpack.c.bf16 %v452, %v450
      %v497 = vpack.c.bf16 %v464, %v462
      %v498 = vpack.c.bf16 %v468, %v466
      %v499 = vpack.c.bf16 %v472, %v470
      %v500 = vpack.c.bf16 %v476, %v474
      %502 = vrot.lane.b32.xlu0 %v485, 96
      %v503 = vpop.permute.xlu0 %502
      %vm504 = vcmask 64512
      %v506 = vsel %vm504, %v485, 0
      %v509 = vsel %vm504, %v503, 0
      %511 = vmatprep.subr.bf16.mxu0 0
      %512 = vmatpush1.bf16.xpose.msra.mxu0 %v509
      %513 = vmatprep.subr.bf16.mxu0 0
      %514 = vmatpush1.bf16.xpose.msra.mxu0 0
      %515 = vmatprep.subr.bf16.mxu0 0
      %516 = vmatpush1.bf16.xpose.msra.mxu0 0
      %517 = vmatprep.subr.bf16.mxu0 0
      %518 = vmatpush1.bf16.xpose.msra.mxu0 0
      %519 = vmatprep.subr.bf16.mxu0 0
      %520 = vmatpush1.bf16.xpose.msra.mxu0 0
      %521 = vmatprep.subr.bf16.mxu0 0
      %522 = vmatpush1.bf16.xpose.msra.mxu0 0
      %523 = vmatprep.subr.bf16.mxu0 0
      %524 = vmatpush1.bf16.xpose.msra.mxu0 0
      %525 = vmatprep.subr.bf16.mxu0 0
      %526 = vmatpush1.bf16.xpose.msra.mxu0 0
      %527 = vmatprep.subr.bf16.mxu0 0
      %528 = vmatpush1.bf16.xpose.msra.mxu0 0
      %529 = vmatprep.subr.bf16.mxu0 0
      %530 = vmatpush1.bf16.xpose.msra.mxu0 0
      %531 = vmatprep.subr.bf16.mxu0 0
      %532 = vmatpush1.bf16.xpose.msra.mxu0 0
      %533 = vmatprep.subr.bf16.mxu0 0
      %534 = vmatpush1.bf16.xpose.msra.mxu0 0
      %535 = vmatprep.subr.bf16.mxu0 0
      %536 = vmatpush1.bf16.xpose.msra.mxu0 0
      %537 = vmatprep.subr.bf16.mxu0 0
      %538 = vmatpush1.bf16.xpose.msra.mxu0 0
      %539 = vmatprep.subr.bf16.mxu0 0
      %540 = vmatpush1.bf16.xpose.msra.mxu0 0
      %541 = vmatprep.subr.bf16.mxu0 0
      %542 = vmatpush1.bf16.xpose.msra.mxu0 0
      %543 = vmatprep.mubr.bf16.mxu0 0
      %544 = vmatmul.mubr.bf16.gmra.mrb[0].mxu0 %v506
      %v545 = vpop.f32.mrb[0].mxu0
      %v546 = vadd.f32 0.0, %v545
      %v547 = vpop.f32.mrb[0].mxu0
      %v548 = vpop.f32.mrb[0].mxu0
      %v549 = vadd.f32 0.0, %v548
      %v550 = vpop.f32.mrb[0].mxu0
      %551 = vdwg.mxu0
      %553 = vrot.lane.b32.xlu0 %v486, 96
      %v554 = vpop.permute.xlu0 %553
      %v556 = vsel %vm504, %v486, 0
      %v559 = vsel %vm504, %v554, 0
      %561 = vmatprep.subr.bf16.mxu0 0
      %562 = vmatpush1.bf16.xpose.msra.mxu0 %v559
      %563 = vmatprep.subr.bf16.mxu0 0
      %564 = vmatpush1.bf16.xpose.msra.mxu0 0
      %565 = vmatprep.subr.bf16.mxu0 0
      %566 = vmatpush1.bf16.xpose.msra.mxu0 0
      %567 = vmatprep.subr.bf16.mxu0 0
      %568 = vmatpush1.bf16.xpose.msra.mxu0 0
      %569 = vmatprep.subr.bf16.mxu0 0
      %570 = vmatpush1.bf16.xpose.msra.mxu0 0
      %571 = vmatprep.subr.bf16.mxu0 0
      %572 = vmatpush1.bf16.xpose.msra.mxu0 0
      %573 = vmatprep.subr.bf16.mxu0 0
      %574 = vmatpush1.bf16.xpose.msra.mxu0 0
      %575 = vmatprep.subr.bf16.mxu0 0
      %576 = vmatpush1.bf16.xpose.msra.mxu0 0
      %577 = vmatprep.subr.bf16.mxu0 0
      %578 = vmatpush1.bf16.xpose.msra.mxu0 0
      %579 = vmatprep.subr.bf16.mxu0 0
      %580 = vmatpush1.bf16.xpose.msra.mxu0 0
      %581 = vmatprep.subr.bf16.mxu0 0
      %582 = vmatpush1.bf16.xpose.msra.mxu0 0
      %583 = vmatprep.subr.bf16.mxu0 0
      %584 = vmatpush1.bf16.xpose.msra.mxu0 0
      %585 = vmatprep.subr.bf16.mxu0 0
      %586 = vmatpush1.bf16.xpose.msra.mxu0 0
      %587 = vmatprep.subr.bf16.mxu0 0
      %588 = vmatpush1.bf16.xpose.msra.mxu0 0
      %589 = vmatprep.subr.bf16.mxu0 0
      %590 = vmatpush1.bf16.xpose.msra.mxu0 0
      %591 = vmatprep.subr.bf16.mxu0 0
      %592 = vmatpush1.bf16.xpose.msra.mxu0 0
      %593 = vmatprep.mubr.bf16.mxu0 0
      %594 = vmatmul.mubr.bf16.gmra.mrb[0].mxu0 %v556
      %v595 = vpop.f32.mrb[0].mxu0
      %v596 = vadd.f32 0.0, %v595
      %v597 = vpop.f32.mrb[0].mxu0
      %v598 = vpop.f32.mrb[0].mxu0
      %v599 = vadd.f32 0.0, %v598
      %v600 = vpop.f32.mrb[0].mxu0
      %601 = vdwg.mxu0
      %603 = vrot.lane.b32.xlu0 %v487, 96
      %v604 = vpop.permute.xlu0 %603
      %v606 = vsel %vm504, %v487, 0
      %v609 = vsel %vm504, %v604, 0
      %611 = vmatprep.subr.bf16.mxu0 0
      %612 = vmatpush1.bf16.xpose.msra.mxu0 %v609
      %613 = vmatprep.subr.bf16.mxu0 0
      %614 = vmatpush1.bf16.xpose.msra.mxu0 0
      %615 = vmatprep.subr.bf16.mxu0 0
      %616 = vmatpush1.bf16.xpose.msra.mxu0 0
      %617 = vmatprep.subr.bf16.mxu0 0
      %618 = vmatpush1.bf16.xpose.msra.mxu0 0
      %619 = vmatprep.subr.bf16.mxu0 0
      %620 = vmatpush1.bf16.xpose.msra.mxu0 0
      %621 = vmatprep.subr.bf16.mxu0 0
      %622 = vmatpush1.bf16.xpose.msra.mxu0 0
      %623 = vmatprep.subr.bf16.mxu0 0
      %624 = vmatpush1.bf16.xpose.msra.mxu0 0
      %625 = vmatprep.subr.bf16.mxu0 0
      %626 = vmatpush1.bf16.xpose.msra.mxu0 0
      %627 = vmatprep.subr.bf16.mxu0 0
      %628 = vmatpush1.bf16.xpose.msra.mxu0 0
      %629 = vmatprep.subr.bf16.mxu0 0
      %630 = vmatpush1.bf16.xpose.msra.mxu0 0
      %631 = vmatprep.subr.bf16.mxu0 0
      %632 = vmatpush1.bf16.xpose.msra.mxu0 0
      %633 = vmatprep.subr.bf16.mxu0 0
      %634 = vmatpush1.bf16.xpose.msra.mxu0 0
      %635 = vmatprep.subr.bf16.mxu0 0
      %636 = vmatpush1.bf16.xpose.msra.mxu0 0
      %637 = vmatprep.subr.bf16.mxu0 0
      %638 = vmatpush1.bf16.xpose.msra.mxu0 0
      %639 = vmatprep.subr.bf16.mxu0 0
      %640 = vmatpush1.bf16.xpose.msra.mxu0 0
      %641 = vmatprep.subr.bf16.mxu0 0
      %642 = vmatpush1.bf16.xpose.msra.mxu0 0
      %643 = vmatprep.mubr.bf16.mxu0 0
      %644 = vmatmul.mubr.bf16.gmra.mrb[0].mxu0 %v606
      %v645 = vpop.f32.mrb[0].mxu0
      %v646 = vadd.f32 0.0, %v645
      %v647 = vpop.f32.mrb[0].mxu0
      %v648 = vpop.f32.mrb[0].mxu0
      %v649 = vadd.f32 0.0, %v648
      %v650 = vpop.f32.mrb[0].mxu0
      %651 = vdwg.mxu0
      %653 = vrot.lane.b32.xlu0 %v488, 96
      %v654 = vpop.permute.xlu0 %653
      %v656 = vsel %vm504, %v488, 0
      %v659 = vsel %vm504, %v654, 0
      %661 = vmatprep.subr.bf16.mxu0 0
      %662 = vmatpush1.bf16.xpose.msra.mxu0 %v659
      %663 = vmatprep.subr.bf16.mxu0 0
      %664 = vmatpush1.bf16.xpose.msra.mxu0 0
      %665 = vmatprep.subr.bf16.mxu0 0
      %666 = vmatpush1.bf16.xpose.msra.mxu0 0
      %667 = vmatprep.subr.bf16.mxu0 0
      %668 = vmatpush1.bf16.xpose.msra.mxu0 0
      %669 = vmatprep.subr.bf16.mxu0 0
      %670 = vmatpush1.bf16.xpose.msra.mxu0 0
      %671 = vmatprep.subr.bf16.mxu0 0
      %672 = vmatpush1.bf16.xpose.msra.mxu0 0
      %673 = vmatprep.subr.bf16.mxu0 0
      %674 = vmatpush1.bf16.xpose.msra.mxu0 0
      %675 = vmatprep.subr.bf16.mxu0 0
      %676 = vmatpush1.bf16.xpose.msra.mxu0 0
      %677 = vmatprep.subr.bf16.mxu0 0
      %678 = vmatpush1.bf16.xpose.msra.mxu0 0
      %679 = vmatprep.subr.bf16.mxu0 0
      %680 = vmatpush1.bf16.xpose.msra.mxu0 0
      %681 = vmatprep.subr.bf16.mxu0 0
      %682 = vmatpush1.bf16.xpose.msra.mxu0 0
      %683 = vmatprep.subr.bf16.mxu0 0
      %684 = vmatpush1.bf16.xpose.msra.mxu0 0
      %685 = vmatprep.subr.bf16.mxu0 0
      %686 = vmatpush1.bf16.xpose.msra.mxu0 0
      %687 = vmatprep.subr.bf16.mxu0 0
      %688 = vmatpush1.bf16.xpose.msra.mxu0 0
      %689 = vmatprep.subr.bf16.mxu0 0
      %690 = vmatpush1.bf16.xpose.msra.mxu0 0
      %691 = vmatprep.subr.bf16.mxu0 0
      %692 = vmatpush1.bf16.xpose.msra.mxu0 0
      %693 = vmatprep.mubr.bf16.mxu0 0
      %694 = vmatmul.mubr.bf16.gmra.mrb[0].mxu0 %v656
      %v695 = vpop.f32.mrb[0].mxu0
      %v696 = vadd.f32 0.0, %v695
      %v697 = vpop.f32.mrb[0].mxu0
      %v698 = vpop.f32.mrb[0].mxu0
      %v699 = vadd.f32 0.0, %v698
      %v700 = vpop.f32.mrb[0].mxu0
      %701 = vdwg.mxu0
      %703 = vrot.lane.b32.xlu0 %v489, 96
      %v704 = vpop.permute.xlu0 %703
      %v706 = vsel %vm504, %v489, 0
      %v709 = vsel %vm504, %v704, 0
      %711 = vmatprep.subr.bf16.mxu0 0
      %712 = vmatpush1.bf16.xpose.msra.mxu0 %v709
      %713 = vmatprep.subr.bf16.mxu0 0
      %714 = vmatpush1.bf16.xpose.msra.mxu0 0
      %715 = vmatprep.subr.bf16.mxu0 0
      %716 = vmatpush1.bf16.xpose.msra.mxu0 0
      %717 = vmatprep.subr.bf16.mxu0 0
      %718 = vmatpush1.bf16.xpose.msra.mxu0 0
      %719 = vmatprep.subr.bf16.mxu0 0
      %720 = vmatpush1.bf16.xpose.msra.mxu0 0
      %721 = vmatprep.subr.bf16.mxu0 0
      %722 = vmatpush1.bf16.xpose.msra.mxu0 0
      %723 = vmatprep.subr.bf16.mxu0 0
      %724 = vmatpush1.bf16.xpose.msra.mxu0 0
      %725 = vmatprep.subr.bf16.mxu0 0
      %726 = vmatpush1.bf16.xpose.msra.mxu0 0
      %727 = vmatprep.subr.bf16.mxu0 0
      %728 = vmatpush1.bf16.xpose.msra.mxu0 0
      %729 = vmatprep.subr.bf16.mxu0 0
      %730 = vmatpush1.bf16.xpose.msra.mxu0 0
      %731 = vmatprep.subr.bf16.mxu0 0
      %732 = vmatpush1.bf16.xpose.msra.mxu0 0
      %733 = vmatprep.subr.bf16.mxu0 0
      %734 = vmatpush1.bf16.xpose.msra.mxu0 0
      %735 = vmatprep.subr.bf16.mxu0 0
      %736 = vmatpush1.bf16.xpose.msra.mxu0 0
      %737 = vmatprep.subr.bf16.mxu0 0
      %738 = vmatpush1.bf16.xpose.msra.mxu0 0
      %739 = vmatprep.subr.bf16.mxu0 0
      %740 = vmatpush1.bf16.xpose.msra.mxu0 0
      %741 = vmatprep.subr.bf16.mxu0 0
      %742 = vmatpush1.bf16.xpose.msra.mxu0 0
      %743 = vmatprep.mubr.bf16.mxu0 0
      %744 = vmatmul.mubr.bf16.gmra.mrb[0].mxu0 %v706
      %v745 = vpop.f32.mrb[0].mxu0
      %v746 = vadd.f32 0.0, %v745
      %v747 = vpop.f32.mrb[0].mxu0
      %v748 = vpop.f32.mrb[0].mxu0
      %v749 = vadd.f32 0.0, %v748
      %v750 = vpop.f32.mrb[0].mxu0
      %751 = vdwg.mxu0
      %753 = vrot.lane.b32.xlu0 %v490, 96
      %v754 = vpop.permute.xlu0 %753
      %v756 = vsel %vm504, %v490, 0
      %v759 = vsel %vm504, %v754, 0
      %761 = vmatprep.subr.bf16.mxu0 0
      %762 = vmatpush1.bf16.xpose.msra.mxu0 %v759
      %763 = vmatprep.subr.bf16.mxu0 0
      %764 = vmatpush1.bf16.xpose.msra.mxu0 0
      %765 = vmatprep.subr.bf16.mxu0 0
      %766 = vmatpush1.bf16.xpose.msra.mxu0 0
      %767 = vmatprep.subr.bf16.mxu0 0
      %768 = vmatpush1.bf16.xpose.msra.mxu0 0
      %769 = vmatprep.subr.bf16.mxu0 0
      %770 = vmatpush1.bf16.xpose.msra.mxu0 0
      %771 = vmatprep.subr.bf16.mxu0 0
      %772 = vmatpush1.bf16.xpose.msra.mxu0 0
      %773 = vmatprep.subr.bf16.mxu0 0
      %774 = vmatpush1.bf16.xpose.msra.mxu0 0
      %775 = vmatprep.subr.bf16.mxu0 0
      %776 = vmatpush1.bf16.xpose.msra.mxu0 0
      %777 = vmatprep.subr.bf16.mxu0 0
      %778 = vmatpush1.bf16.xpose.msra.mxu0 0
      %779 = vmatprep.subr.bf16.mxu0 0
      %780 = vmatpush1.bf16.xpose.msra.mxu0 0
      %781 = vmatprep.subr.bf16.mxu0 0
      %782 = vmatpush1.bf16.xpose.msra.mxu0 0
      %783 = vmatprep.subr.bf16.mxu0 0
      %784 = vmatpush1.bf16.xpose.msra.mxu0 0
      %785 = vmatprep.subr.bf16.mxu0 0
      %786 = vmatpush1.bf16.xpose.msra.mxu0 0
      %787 = vmatprep.subr.bf16.mxu0 0
      %788 = vmatpush1.bf16.xpose.msra.mxu0 0
      %789 = vmatprep.subr.bf16.mxu0 0
      %790 = vmatpush1.bf16.xpose.msra.mxu0 0
      %791 = vmatprep.subr.bf16.mxu0 0
      %792 = vmatpush1.bf16.xpose.msra.mxu0 0
      %793 = vmatprep.mubr.bf16.mxu0 0
      %794 = vmatmul.mubr.bf16.gmra.mrb[0].mxu0 %v756
      %v795 = vpop.f32.mrb[0].mxu0
      %v796 = vadd.f32 0.0, %v795
      %v797 = vpop.f32.mrb[0].mxu0
      %v798 = vpop.f32.mrb[0].mxu0
      %v799 = vadd.f32 0.0, %v798
      %v800 = vpop.f32.mrb[0].mxu0
      %801 = vdwg.mxu0
      %803 = vrot.lane.b32.xlu0 %v491, 96
      %v804 = vpop.permute.xlu0 %803
      %v806 = vsel %vm504, %v491, 0
      %v809 = vsel %vm504, %v804, 0
      %811 = vmatprep.subr.bf16.mxu0 0
      %812 = vmatpush1.bf16.xpose.msra.mxu0 %v809
      %813 = vmatprep.subr.bf16.mxu0 0
      %814 = vmatpush1.bf16.xpose.msra.mxu0 0
      %815 = vmatprep.subr.bf16.mxu0 0
      %816 = vmatpush1.bf16.xpose.msra.mxu0 0
      %817 = vmatprep.subr.bf16.mxu0 0
      %818 = vmatpush1.bf16.xpose.msra.mxu0 0
      %819 = vmatprep.subr.bf16.mxu0 0
      %820 = vmatpush1.bf16.xpose.msra.mxu0 0
      %821 = vmatprep.subr.bf16.mxu0 0
      %822 = vmatpush1.bf16.xpose.msra.mxu0 0
      %823 = vmatprep.subr.bf16.mxu0 0
      %824 = vmatpush1.bf16.xpose.msra.mxu0 0
      %825 = vmatprep.subr.bf16.mxu0 0
      %826 = vmatpush1.bf16.xpose.msra.mxu0 0
      %827 = vmatprep.subr.bf16.mxu0 0
      %828 = vmatpush1.bf16.xpose.msra.mxu0 0
      %829 = vmatprep.subr.bf16.mxu0 0
      %830 = vmatpush1.bf16.xpose.msra.mxu0 0
      %831 = vmatprep.subr.bf16.mxu0 0
      %832 = vmatpush1.bf16.xpose.msra.mxu0 0
      %833 = vmatprep.subr.bf16.mxu0 0
      %834 = vmatpush1.bf16.xpose.msra.mxu0 0
      %835 = vmatprep.subr.bf16.mxu0 0
      %836 = vmatpush1.bf16.xpose.msra.mxu0 0
      %837 = vmatprep.subr.bf16.mxu0 0
      %838 = vmatpush1.bf16.xpose.msra.mxu0 0
      %839 = vmatprep.subr.bf16.mxu0 0
      %840 = vmatpush1.bf16.xpose.msra.mxu0 0
      %841 = vmatprep.subr.bf16.mxu0 0
      %842 = vmatpush1.bf16.xpose.msra.mxu0 0
      %843 = vmatprep.mubr.bf16.mxu0 0
      %844 = vmatmul.mubr.bf16.gmra.mrb[0].mxu0 %v806
      %v845 = vpop.f32.mrb[0].mxu0
      %v846 = vadd.f32 0.0, %v845
      %v847 = vpop.f32.mrb[0].mxu0
      %v848 = vpop.f32.mrb[0].mxu0
      %v849 = vadd.f32 0.0, %v848
      %v850 = vpop.f32.mrb[0].mxu0
      %851 = vdwg.mxu0
      %853 = vrot.lane.b32.xlu0 %v492, 96
      %v854 = vpop.permute.xlu0 %853
      %v856 = vsel %vm504, %v492, 0
      %v859 = vsel %vm504, %v854, 0
      %861 = vmatprep.subr.bf16.mxu0 0
      %862 = vmatpush1.bf16.xpose.msra.mxu0 %v859
      %863 = vmatprep.subr.bf16.mxu0 0
      %864 = vmatpush1.bf16.xpose.msra.mxu0 0
      %865 = vmatprep.subr.bf16.mxu0 0
      %866 = vmatpush1.bf16.xpose.msra.mxu0 0
      %867 = vmatprep.subr.bf16.mxu0 0
      %868 = vmatpush1.bf16.xpose.msra.mxu0 0
      %869 = vmatprep.subr.bf16.mxu0 0
      %870 = vmatpush1.bf16.xpose.msra.mxu0 0
      %871 = vmatprep.subr.bf16.mxu0 0
      %872 = vmatpush1.bf16.xpose.msra.mxu0 0
      %873 = vmatprep.subr.bf16.mxu0 0
      %874 = vmatpush1.bf16.xpose.msra.mxu0 0
      %875 = vmatprep.subr.bf16.mxu0 0
      %876 = vmatpush1.bf16.xpose.msra.mxu0 0
      %877 = vmatprep.subr.bf16.mxu0 0
      %878 = vmatpush1.bf16.xpose.msra.mxu0 0
      %879 = vmatprep.subr.bf16.mxu0 0
      %880 = vmatpush1.bf16.xpose.msra.mxu0 0
      %881 = vmatprep.subr.bf16.mxu0 0
      %882 = vmatpush1.bf16.xpose.msra.mxu0 0
      %883 = vmatprep.subr.bf16.mxu0 0
      %884 = vmatpush1.bf16.xpose.msra.mxu0 0
      %885 = vmatprep.subr.bf16.mxu0 0
      %886 = vmatpush1.bf16.xpose.msra.mxu0 0
      %887 = vmatprep.subr.bf16.mxu0 0
      %888 = vmatpush1.bf16.xpose.msra.mxu0 0
      %889 = vmatprep.subr.bf16.mxu0 0
      %890 = vmatpush1.bf16.xpose.msra.mxu0 0
      %891 = vmatprep.subr.bf16.mxu0 0
      %892 = vmatpush1.bf16.xpose.msra.mxu0 0
      %893 = vmatprep.mubr.bf16.mxu0 0
      %894 = vmatmul.mubr.bf16.gmra.mrb[0].mxu0 %v856
      %v895 = vpop.f32.mrb[0].mxu0
      %v896 = vadd.f32 0.0, %v895
      %v897 = vpop.f32.mrb[0].mxu0
      %v898 = vpop.f32.mrb[0].mxu0
      %v899 = vadd.f32 0.0, %v898
      %v900 = vpop.f32.mrb[0].mxu0
      %901 = vdwg.mxu0
      %903 = vrot.lane.b32.xlu0 %v493, 96
      %v904 = vpop.permute.xlu0 %903
      %v906 = vsel %vm504, %v493, 0
      %v909 = vsel %vm504, %v904, 0
      %911 = vmatprep.subr.bf16.mxu0 0
      %912 = vmatpush1.bf16.xpose.msra.mxu0 %v909
      %913 = vmatprep.subr.bf16.mxu0 0
      %914 = vmatpush1.bf16.xpose.msra.mxu0 0
      %915 = vmatprep.subr.bf16.mxu0 0
      %916 = vmatpush1.bf16.xpose.msra.mxu0 0
      %917 = vmatprep.subr.bf16.mxu0 0
      %918 = vmatpush1.bf16.xpose.msra.mxu0 0
      %919 = vmatprep.subr.bf16.mxu0 0
      %920 = vmatpush1.bf16.xpose.msra.mxu0 0
      %921 = vmatprep.subr.bf16.mxu0 0
      %922 = vmatpush1.bf16.xpose.msra.mxu0 0
      %923 = vmatprep.subr.bf16.mxu0 0
      %924 = vmatpush1.bf16.xpose.msra.mxu0 0
      %925 = vmatprep.subr.bf16.mxu0 0
      %926 = vmatpush1.bf16.xpose.msra.mxu0 0
      %927 = vmatprep.subr.bf16.mxu0 0
      %928 = vmatpush1.bf16.xpose.msra.mxu0 0
      %929 = vmatprep.subr.bf16.mxu0 0
      %930 = vmatpush1.bf16.xpose.msra.mxu0 0
      %931 = vmatprep.subr.bf16.mxu0 0
      %932 = vmatpush1.bf16.xpose.msra.mxu0 0
      %933 = vmatprep.subr.bf16.mxu0 0
      %934 = vmatpush1.bf16.xpose.msra.mxu0 0
      %935 = vmatprep.subr.bf16.mxu0 0
      %936 = vmatpush1.bf16.xpose.msra.mxu0 0
      %937 = vmatprep.subr.bf16.mxu0 0
      %938 = vmatpush1.bf16.xpose.msra.mxu0 0
      %939 = vmatprep.subr.bf16.mxu0 0
      %940 = vmatpush1.bf16.xpose.msra.mxu0 0
      %941 = vmatprep.subr.bf16.mxu0 0
      %942 = vmatpush1.bf16.xpose.msra.mxu0 0
      %943 = vmatprep.mubr.bf16.mxu0 0
      %944 = vmatmul.mubr.bf16.gmra.mrb[0].mxu0 %v906
      %v945 = vpop.f32.mrb[0].mxu0
      %v946 = vadd.f32 0.0, %v945
      %v947 = vpop.f32.mrb[0].mxu0
      %v948 = vpop.f32.mrb[0].mxu0
      %v949 = vadd.f32 0.0, %v948
      %v950 = vpop.f32.mrb[0].mxu0
      %951 = vdwg.mxu0
      %953 = vrot.lane.b32.xlu0 %v494, 96
      %v954 = vpop.permute.xlu0 %953
      %v956 = vsel %vm504, %v494, 0
      %v959 = vsel %vm504, %v954, 0
      %961 = vmatprep.subr.bf16.mxu0 0
      %962 = vmatpush1.bf16.xpose.msra.mxu0 %v959
      %963 = vmatprep.subr.bf16.mxu0 0
      %964 = vmatpush1.bf16.xpose.msra.mxu0 0
      %965 = vmatprep.subr.bf16.mxu0 0
      %966 = vmatpush1.bf16.xpose.msra.mxu0 0
      %967 = vmatprep.subr.bf16.mxu0 0
      %968 = vmatpush1.bf16.xpose.msra.mxu0 0
      %969 = vmatprep.subr.bf16.mxu0 0
      %970 = vmatpush1.bf16.xpose.msra.mxu0 0
      %971 = vmatprep.subr.bf16.mxu0 0
      %972 = vmatpush1.bf16.xpose.msra.mxu0 0
      %973 = vmatprep.subr.bf16.mxu0 0
      %974 = vmatpush1.bf16.xpose.msra.mxu0 0
      %975 = vmatprep.subr.bf16.mxu0 0
      %976 = vmatpush1.bf16.xpose.msra.mxu0 0
      %977 = vmatprep.subr.bf16.mxu0 0
      %978 = vmatpush1.bf16.xpose.msra.mxu0 0
      %979 = vmatprep.subr.bf16.mxu0 0
      %980 = vmatpush1.bf16.xpose.msra.mxu0 0
      %981 = vmatprep.subr.bf16.mxu0 0
      %982 = vmatpush1.bf16.xpose.msra.mxu0 0
      %983 = vmatprep.subr.bf16.mxu0 0
      %984 = vmatpush1.bf16.xpose.msra.mxu0 0
      %985 = vmatprep.subr.bf16.mxu0 0
      %986 = vmatpush1.bf16.xpose.msra.mxu0 0
      %987 = vmatprep.subr.bf16.mxu0 0
      %988 = vmatpush1.bf16.xpose.msra.mxu0 0
      %989 = vmatprep.subr.bf16.mxu0 0
      %990 = vmatpush1.bf16.xpose.msra.mxu0 0
      %991 = vmatprep.subr.bf16.mxu0 0
      %992 = vmatpush1.bf16.xpose.msra.mxu0 0
      %993 = vmatprep.mubr.bf16.mxu0 0
      %994 = vmatmul.mubr.bf16.gmra.mrb[0].mxu0 %v956
      %v995 = vpop.f32.mrb[0].mxu0
      %v996 = vadd.f32 0.0, %v995
      %v997 = vpop.f32.mrb[0].mxu0
      %v998 = vpop.f32.mrb[0].mxu0
      %v999 = vadd.f32 0.0, %v998
      %v1000 = vpop.f32.mrb[0].mxu0
      %1001 = vdwg.mxu0
      %1003 = vrot.lane.b32.xlu0 %v495, 96
      %v1004 = vpop.permute.xlu0 %1003
      %v1006 = vsel %vm504, %v495, 0
      %v1009 = vsel %vm504, %v1004, 0
      %1011 = vmatprep.subr.bf16.mxu0 0
      %1012 = vmatpush1.bf16.xpose.msra.mxu0 %v1009
      %1013 = vmatprep.subr.bf16.mxu0 0
      %1014 = vmatpush1.bf16.xpose.msra.mxu0 0
      %1015 = vmatprep.subr.bf16.mxu0 0
      %1016 = vmatpush1.bf16.xpose.msra.mxu0 0
      %1017 = vmatprep.subr.bf16.mxu0 0
      %1018 = vmatpush1.bf16.xpose.msra.mxu0 0
      %1019 = vmatprep.subr.bf16.mxu0 0
      %1020 = vmatpush1.bf16.xpose.msra.mxu0 0
      %1021 = vmatprep.subr.bf16.mxu0 0
      %1022 = vmatpush1.bf16.xpose.msra.mxu0 0
      %1023 = vmatprep.subr.bf16.mxu0 0
      %1024 = vmatpush1.bf16.xpose.msra.mxu0 0
      %1025 = vmatprep.subr.bf16.mxu0 0
      %1026 = vmatpush1.bf16.xpose.msra.mxu0 0
      %1027 = vmatprep.subr.bf16.mxu0 0
      %1028 = vmatpush1.bf16.xpose.msra.mxu0 0
      %1029 = vmatprep.subr.bf16.mxu0 0
      %1030 = vmatpush1.bf16.xpose.msra.mxu0 0
      %1031 = vmatprep.subr.bf16.mxu0 0
      %1032 = vmatpush1.bf16.xpose.msra.mxu0 0
      %1033 = vmatprep.subr.bf16.mxu0 0
      %1034 = vmatpush1.bf16.xpose.msra.mxu0 0
      %1035 = vmatprep.subr.bf16.mxu0 0
      %1036 = vmatpush1.bf16.xpose.msra.mxu0 0
      %1037 = vmatprep.subr.bf16.mxu0 0
      %1038 = vmatpush1.bf16.xpose.msra.mxu0 0
      %1039 = vmatprep.subr.bf16.mxu0 0
      %1040 = vmatpush1.bf16.xpose.msra.mxu0 0
      %1041 = vmatprep.subr.bf16.mxu0 0
      %1042 = vmatpush1.bf16.xpose.msra.mxu0 0
      %1043 = vmatprep.mubr.bf16.mxu0 0
      %1044 = vmatmul.mubr.bf16.gmra.mrb[0].mxu0 %v1006
      %v1045 = vpop.f32.mrb[0].mxu0
      %v1046 = vadd.f32 0.0, %v1045
      %v1047 = vpop.f32.mrb[0].mxu0
      %v1048 = vpop.f32.mrb[0].mxu0
      %v1049 = vadd.f32 0.0, %v1048
      %v1050 = vpop.f32.mrb[0].mxu0
      %1051 = vdwg.mxu0
      %1053 = vrot.lane.b32.xlu0 %v496, 96
      %v1054 = vpop.permute.xlu0 %1053
      %v1056 = vsel %vm504, %v496, 0
      %v1059 = vsel %vm504, %v1054, 0
      %1061 = vmatprep.subr.bf16.mxu0 0
      %1062 = vmatpush1.bf16.xpose.msra.mxu0 %v1059
      %1063 = vmatprep.subr.bf16.mxu0 0
      %1064 = vmatpush1.bf16.xpose.msra.mxu0 0
      %1065 = vmatprep.subr.bf16.mxu0 0
      %1066 = vmatpush1.bf16.xpose.msra.mxu0 0
      %1067 = vmatprep.subr.bf16.mxu0 0
      %1068 = vmatpush1.bf16.xpose.msra.mxu0 0
      %1069 = vmatprep.subr.bf16.mxu0 0
      %1070 = vmatpush1.bf16.xpose.msra.mxu0 0
      %1071 = vmatprep.subr.bf16.mxu0 0
      %1072 = vmatpush1.bf16.xpose.msra.mxu0 0
      %1073 = vmatprep.subr.bf16.mxu0 0
      %1074 = vmatpush1.bf16.xpose.msra.mxu0 0
      %1075 = vmatprep.subr.bf16.mxu0 0
      %1076 = vmatpush1.bf16.xpose.msra.mxu0 0
      %1077 = vmatprep.subr.bf16.mxu0 0
      %1078 = vmatpush1.bf16.xpose.msra.mxu0 0
      %1079 = vmatprep.subr.bf16.mxu0 0
      %1080 = vmatpush1.bf16.xpose.msra.mxu0 0
      %1081 = vmatprep.subr.bf16.mxu0 0
      %1082 = vmatpush1.bf16.xpose.msra.mxu0 0
      %1083 = vmatprep.subr.bf16.mxu0 0
      %1084 = vmatpush1.bf16.xpose.msra.mxu0 0
      %1085 = vmatprep.subr.bf16.mxu0 0
      %1086 = vmatpush1.bf16.xpose.msra.mxu0 0
      %1087 = vmatprep.subr.bf16.mxu0 0
      %1088 = vmatpush1.bf16.xpose.msra.mxu0 0
      %1089 = vmatprep.subr.bf16.mxu0 0
      %1090 = vmatpush1.bf16.xpose.msra.mxu0 0
      %1091 = vmatprep.subr.bf16.mxu0 0
      %1092 = vmatpush1.bf16.xpose.msra.mxu0 0
      %1093 = vmatprep.mubr.bf16.mxu0 0
      %1094 = vmatmul.mubr.bf16.gmra.mrb[0].mxu0 %v1056
      %v1095 = vpop.f32.mrb[0].mxu0
      %v1096 = vadd.f32 0.0, %v1095
      %v1097 = vpop.f32.mrb[0].mxu0
      %v1098 = vpop.f32.mrb[0].mxu0
      %v1099 = vadd.f32 0.0, %v1098
      %v1100 = vpop.f32.mrb[0].mxu0
      %1101 = vdwg.mxu0
      %1103 = vrot.lane.b32.xlu0 %v497, 96
      %v1104 = vpop.permute.xlu0 %1103
      %v1106 = vsel %vm504, %v497, 0
      %v1109 = vsel %vm504, %v1104, 0
      %1111 = vmatprep.subr.bf16.mxu0 0
      %1112 = vmatpush1.bf16.xpose.msra.mxu0 %v1109
      %1113 = vmatprep.subr.bf16.mxu0 0
      %1114 = vmatpush1.bf16.xpose.msra.mxu0 0
      %1115 = vmatprep.subr.bf16.mxu0 0
      %1116 = vmatpush1.bf16.xpose.msra.mxu0 0
      %1117 = vmatprep.subr.bf16.mxu0 0
      %1118 = vmatpush1.bf16.xpose.msra.mxu0 0
      %1119 = vmatprep.subr.bf16.mxu0 0
      %1120 = vmatpush1.bf16.xpose.msra.mxu0 0
      %1121 = vmatprep.subr.bf16.mxu0 0
      %1122 = vmatpush1.bf16.xpose.msra.mxu0 0
      %1123 = vmatprep.subr.bf16.mxu0 0
      %1124 = vmatpush1.bf16.xpose.msra.mxu0 0
      %1125 = vmatprep.subr.bf16.mxu0 0
      %1126 = vmatpush1.bf16.xpose.msra.mxu0 0
      %1127 = vmatprep.subr.bf16.mxu0 0
      %1128 = vmatpush1.bf16.xpose.msra.mxu0 0
      %1129 = vmatprep.subr.bf16.mxu0 0
      %1130 = vmatpush1.bf16.xpose.msra.mxu0 0
      %1131 = vmatprep.subr.bf16.mxu0 0
      %1132 = vmatpush1.bf16.xpose.msra.mxu0 0
      %1133 = vmatprep.subr.bf16.mxu0 0
      %1134 = vmatpush1.bf16.xpose.msra.mxu0 0
      %1135 = vmatprep.subr.bf16.mxu0 0
      %1136 = vmatpush1.bf16.xpose.msra.mxu0 0
      %1137 = vmatprep.subr.bf16.mxu0 0
      %1138 = vmatpush1.bf16.xpose.msra.mxu0 0
      %1139 = vmatprep.subr.bf16.mxu0 0
      %1140 = vmatpush1.bf16.xpose.msra.mxu0 0
      %1141 = vmatprep.subr.bf16.mxu0 0
      %1142 = vmatpush1.bf16.xpose.msra.mxu0 0
      %1143 = vmatprep.mubr.bf16.mxu0 0
      %1144 = vmatmul.mubr.bf16.gmra.mrb[0].mxu0 %v1106
      %v1145 = vpop.f32.mrb[0].mxu0
      %v1146 = vadd.f32 0.0, %v1145
      %v1147 = vpop.f32.mrb[0].mxu0
      %v1148 = vpop.f32.mrb[0].mxu0
      %v1149 = vadd.f32 0.0, %v1148
      %v1150 = vpop.f32.mrb[0].mxu0
      %1151 = vdwg.mxu0
      %1153 = vrot.lane.b32.xlu0 %v498, 96
      %v1154 = vpop.permute.xlu0 %1153
      %v1156 = vsel %vm504, %v498, 0
      %v1159 = vsel %vm504, %v1154, 0
      %1161 = vmatprep.subr.bf16.mxu0 0
      %1162 = vmatpush1.bf16.xpose.msra.mxu0 %v1159
      %1163 = vmatprep.subr.bf16.mxu0 0
      %1164 = vmatpush1.bf16.xpose.msra.mxu0 0
      %1165 = vmatprep.subr.bf16.mxu0 0
      %1166 = vmatpush1.bf16.xpose.msra.mxu0 0
      %1167 = vmatprep.subr.bf16.mxu0 0
      %1168 = vmatpush1.bf16.xpose.msra.mxu0 0
      %1169 = vmatprep.subr.bf16.mxu0 0
      %1170 = vmatpush1.bf16.xpose.msra.mxu0 0
      %1171 = vmatprep.subr.bf16.mxu0 0
      %1172 = vmatpush1.bf16.xpose.msra.mxu0 0
      %1173 = vmatprep.subr.bf16.mxu0 0
      %1174 = vmatpush1.bf16.xpose.msra.mxu0 0
      %1175 = vmatprep.subr.bf16.mxu0 0
      %1176 = vmatpush1.bf16.xpose.msra.mxu0 0
      %1177 = vmatprep.subr.bf16.mxu0 0
      %1178 = vmatpush1.bf16.xpose.msra.mxu0 0
      %1179 = vmatprep.subr.bf16.mxu0 0
      %1180 = vmatpush1.bf16.xpose.msra.mxu0 0
      %1181 = vmatprep.subr.bf16.mxu0 0
      %1182 = vmatpush1.bf16.xpose.msra.mxu0 0
      %1183 = vmatprep.subr.bf16.mxu0 0
      %1184 = vmatpush1.bf16.xpose.msra.mxu0 0
      %1185 = vmatprep.subr.bf16.mxu0 0
      %1186 = vmatpush1.bf16.xpose.msra.mxu0 0
      %1187 = vmatprep.subr.bf16.mxu0 0
      %1188 = vmatpush1.bf16.xpose.msra.mxu0 0
      %1189 = vmatprep.subr.bf16.mxu0 0
      %1190 = vmatpush1.bf16.xpose.msra.mxu0 0
      %1191 = vmatprep.subr.bf16.mxu0 0
      %1192 = vmatpush1.bf16.xpose.msra.mxu0 0
      %1193 = vmatprep.mubr.bf16.mxu0 0
      %1194 = vmatmul.mubr.bf16.gmra.mrb[0].mxu0 %v1156
      %v1195 = vpop.f32.mrb[0].mxu0
      %v1196 = vadd.f32 0.0, %v1195
      %v1197 = vpop.f32.mrb[0].mxu0
      %v1198 = vpop.f32.mrb[0].mxu0
      %v1199 = vadd.f32 0.0, %v1198
      %v1200 = vpop.f32.mrb[0].mxu0
      %1201 = vdwg.mxu0
      %1203 = vrot.lane.b32.xlu0 %v499, 96
      %v1204 = vpop.permute.xlu0 %1203
      %v1206 = vsel %vm504, %v499, 0
      %v1209 = vsel %vm504, %v1204, 0
      %1211 = vmatprep.subr.bf16.mxu0 0
      %1212 = vmatpush1.bf16.xpose.msra.mxu0 %v1209
      %1213 = vmatprep.subr.bf16.mxu0 0
      %1214 = vmatpush1.bf16.xpose.msra.mxu0 0
      %1215 = vmatprep.subr.bf16.mxu0 0
      %1216 = vmatpush1.bf16.xpose.msra.mxu0 0
      %1217 = vmatprep.subr.bf16.mxu0 0
      %1218 = vmatpush1.bf16.xpose.msra.mxu0 0
      %1219 = vmatprep.subr.bf16.mxu0 0
      %1220 = vmatpush1.bf16.xpose.msra.mxu0 0
      %1221 = vmatprep.subr.bf16.mxu0 0
      %1222 = vmatpush1.bf16.xpose.msra.mxu0 0
      %1223 = vmatprep.subr.bf16.mxu0 0
      %1224 = vmatpush1.bf16.xpose.msra.mxu0 0
      %1225 = vmatprep.subr.bf16.mxu0 0
      %1226 = vmatpush1.bf16.xpose.msra.mxu0 0
      %1227 = vmatprep.subr.bf16.mxu0 0
      %1228 = vmatpush1.bf16.xpose.msra.mxu0 0
      %1229 = vmatprep.subr.bf16.mxu0 0
      %1230 = vmatpush1.bf16.xpose.msra.mxu0 0
      %1231 = vmatprep.subr.bf16.mxu0 0
      %1232 = vmatpush1.bf16.xpose.msra.mxu0 0
      %1233 = vmatprep.subr.bf16.mxu0 0
      %1234 = vmatpush1.bf16.xpose.msra.mxu0 0
      %1235 = vmatprep.subr.bf16.mxu0 0
      %1236 = vmatpush1.bf16.xpose.msra.mxu0 0
      %1237 = vmatprep.subr.bf16.mxu0 0
      %1238 = vmatpush1.bf16.xpose.msra.mxu0 0
      %1239 = vmatprep.subr.bf16.mxu0 0
      %1240 = vmatpush1.bf16.xpose.msra.mxu0 0
      %1241 = vmatprep.subr.bf16.mxu0 0
      %1242 = vmatpush1.bf16.xpose.msra.mxu0 0
      %1243 = vmatprep.mubr.bf16.mxu0 0
      %1244 = vmatmul.mubr.bf16.gmra.mrb[0].mxu0 %v1206
      %v1245 = vpop.f32.mrb[0].mxu0
      %v1246 = vadd.f32 0.0, %v1245
      %v1247 = vpop.f32.mrb[0].mxu0
      %v1248 = vpop.f32.mrb[0].mxu0
      %v1249 = vadd.f32 0.0, %v1248
      %v1250 = vpop.f32.mrb[0].mxu0
      %1251 = vdwg.mxu0
      %1253 = vrot.lane.b32.xlu0 %v500, 96
      %v1254 = vpop.permute.xlu0 %1253
      %v1256 = vsel %vm504, %v500, 0
      %v1259 = vsel %vm504, %v1254, 0
      %1261 = vmatprep.subr.bf16.mxu0 0
      %1262 = vmatpush1.bf16.xpose.msra.mxu0 %v1259
      %1263 = vmatprep.subr.bf16.mxu0 0
      %1264 = vmatpush1.bf16.xpose.msra.mxu0 0
      %1265 = vmatprep.subr.bf16.mxu0 0
      %1266 = vmatpush1.bf16.xpose.msra.mxu0 0
      %1267 = vmatprep.subr.bf16.mxu0 0
      %1268 = vmatpush1.bf16.xpose.msra.mxu0 0
      %1269 = vmatprep.subr.bf16.mxu0 0
      %1270 = vmatpush1.bf16.xpose.msra.mxu0 0
      %1271 = vmatprep.subr.bf16.mxu0 0
      %1272 = vmatpush1.bf16.xpose.msra.mxu0 0
      %1273 = vmatprep.subr.bf16.mxu0 0
      %1274 = vmatpush1.bf16.xpose.msra.mxu0 0
      %1275 = vmatprep.subr.bf16.mxu0 0
      %1276 = vmatpush1.bf16.xpose.msra.mxu0 0
      %1277 = vmatprep.subr.bf16.mxu0 0
      %1278 = vmatpush1.bf16.xpose.msra.mxu0 0
      %1279 = vmatprep.subr.bf16.mxu0 0
      %1280 = vmatpush1.bf16.xpose.msra.mxu0 0
      %1281 = vmatprep.subr.bf16.mxu0 0
      %1282 = vmatpush1.bf16.xpose.msra.mxu0 0
      %1283 = vmatprep.subr.bf16.mxu0 0
      %1284 = vmatpush1.bf16.xpose.msra.mxu0 0
      %1285 = vmatprep.subr.bf16.mxu0 0
      %1286 = vmatpush1.bf16.xpose.msra.mxu0 0
      %1287 = vmatprep.subr.bf16.mxu0 0
      %1288 = vmatpush1.bf16.xpose.msra.mxu0 0
      %1289 = vmatprep.subr.bf16.mxu0 0
      %1290 = vmatpush1.bf16.xpose.msra.mxu0 0
      %1291 = vmatprep.subr.bf16.mxu0 0
      %1292 = vmatpush1.bf16.xpose.msra.mxu0 0
      %1293 = vmatprep.mubr.bf16.mxu0 0
      %1294 = vmatmul.mubr.bf16.gmra.mrb[0].mxu0 %v1256
      %v1295 = vpop.f32.mrb[0].mxu0
      %v1296 = vadd.f32 0.0, %v1295
      %v1297 = vpop.f32.mrb[0].mxu0
      %v1298 = vpop.f32.mrb[0].mxu0
      %v1299 = vadd.f32 0.0, %v1298
      %v1300 = vpop.f32.mrb[0].mxu0
      %1301 = vdwg.mxu0
      %v1302 = vld [vmem:[%s3] sm:$0xff]
      %v1303 = vld [vmem:[%s3 + $0x8] sm:$0xff]
      %v1304 = vld [vmem:[%s3 + $0x10] sm:$0xff]
      %v1305 = vld [vmem:[%s3 + $0x18] sm:$0xff]
      %v1306 = vld [vmem:[%s3 + $0x20] sm:$0xff]
      %v1307 = vld [vmem:[%s3 + $0x28] sm:$0xff]
      %v1308 = vld [vmem:[%s3 + $0x30] sm:$0xff]
      %v1309 = vld [vmem:[%s3 + $0x38] sm:$0xff]
      %v1310 = vadd.f32 %v546, %v1302
      %v1311 = vadd.f32 %v549, %v1303
      %v1312 = vadd.f32 %v596, %v1302
      %v1313 = vadd.f32 %v599, %v1303
      %v1314 = vadd.f32 %v646, %v1302
      %v1315 = vadd.f32 %v649, %v1303
      %v1316 = vadd.f32 %v696, %v1302
      %v1317 = vadd.f32 %v699, %v1303
      %v1318 = vadd.f32 %v746, %v1304
      %v1319 = vadd.f32 %v749, %v1305
      %v1320 = vadd.f32 %v796, %v1304
      %v1321 = vadd.f32 %v799, %v1305
      %v1322 = vadd.f32 %v846, %v1304
      %v1323 = vadd.f32 %v849, %v1305
      %v1324 = vadd.f32 %v896, %v1304
      %v1325 = vadd.f32 %v899, %v1305
      %v1326 = vadd.f32 %v946, %v1306
      %v1327 = vadd.f32 %v949, %v1307
      %v1328 = vadd.f32 %v996, %v1306
      %v1329 = vadd.f32 %v999, %v1307
      %v1330 = vadd.f32 %v1046, %v1306
      %v1331 = vadd.f32 %v1049, %v1307
      %v1332 = vadd.f32 %v1096, %v1306
      %v1333 = vadd.f32 %v1099, %v1307
      %v1334 = vadd.f32 %v1146, %v1308
      %v1335 = vadd.f32 %v1149, %v1309
      %v1336 = vadd.f32 %v1196, %v1308
      %v1337 = vadd.f32 %v1199, %v1309
      %v1338 = vadd.f32 %v1246, %v1308
      %v1339 = vadd.f32 %v1249, %v1309
      %v1340 = vadd.f32 %v1296, %v1308
      %v1341 = vadd.f32 %v1299, %v1309
      %vm1342 = vcmask 130048
      %v1343 = vsel %vm1342, %v1310, -inf
      %1344 = vmax.xlane.f32.xlu0 %v1343
      %v1345 = vpop.xlane.xlu0 %1344
      %v1346 = vsel %vm1342, %v1311, -inf
      %1347 = vmax.xlane.f32.xlu0 %v1346
      %v1348 = vpop.xlane.xlu0 %1347
      %v1349 = vsel %vm1342, %v1312, -inf
      %1350 = vmax.xlane.f32.xlu0 %v1349
      %v1351 = vpop.xlane.xlu0 %1350
      %v1352 = vsel %vm1342, %v1313, -inf
      %1353 = vmax.xlane.f32.xlu0 %v1352
      %v1354 = vpop.xlane.xlu0 %1353
      %v1355 = vsel %vm1342, %v1314, -inf
      %1356 = vmax.xlane.f32.xlu0 %v1355
      %v1357 = vpop.xlane.xlu0 %1356
      %v1358 = vsel %vm1342, %v1315, -inf
      %1359 = vmax.xlane.f32.xlu0 %v1358
      %v1360 = vpop.xlane.xlu0 %1359
      %v1361 = vsel %vm1342, %v1316, -inf
      %1362 = vmax.xlane.f32.xlu0 %v1361
      %v1363 = vpop.xlane.xlu0 %1362
      %v1364 = vsel %vm1342, %v1317, -inf
      %1365 = vmax.xlane.f32.xlu0 %v1364
      %v1366 = vpop.xlane.xlu0 %1365
      %v1367 = vsel %vm1342, %v1318, -inf
      %1368 = vmax.xlane.f32.xlu0 %v1367
      %v1369 = vpop.xlane.xlu0 %1368
      %v1370 = vsel %vm1342, %v1319, -inf
      %1371 = vmax.xlane.f32.xlu0 %v1370
      %v1372 = vpop.xlane.xlu0 %1371
      %v1373 = vsel %vm1342, %v1320, -inf
      %1374 = vmax.xlane.f32.xlu0 %v1373
      %v1375 = vpop.xlane.xlu0 %1374
      %v1376 = vsel %vm1342, %v1321, -inf
      %1377 = vmax.xlane.f32.xlu0 %v1376
      %v1378 = vpop.xlane.xlu0 %1377
      %v1379 = vsel %vm1342, %v1322, -inf
      %1380 = vmax.xlane.f32.xlu0 %v1379
      %v1381 = vpop.xlane.xlu0 %1380
      %v1382 = vsel %vm1342, %v1323, -inf
      %1383 = vmax.xlane.f32.xlu0 %v1382
      %v1384 = vpop.xlane.xlu0 %1383
      %v1385 = vsel %vm1342, %v1324, -inf
      %1386 = vmax.xlane.f32.xlu0 %v1385
      %v1387 = vpop.xlane.xlu0 %1386
      %v1388 = vsel %vm1342, %v1325, -inf
      %1389 = vmax.xlane.f32.xlu0 %v1388
      %v1390 = vpop.xlane.xlu0 %1389
      %v1391 = vsel %vm1342, %v1326, -inf
      %1392 = vmax.xlane.f32.xlu0 %v1391
      %v1393 = vpop.xlane.xlu0 %1392
      %v1394 = vsel %vm1342, %v1327, -inf
      %1395 = vmax.xlane.f32.xlu0 %v1394
      %v1396 = vpop.xlane.xlu0 %1395
      %v1397 = vsel %vm1342, %v1328, -inf
      %1398 = vmax.xlane.f32.xlu0 %v1397
      %v1399 = vpop.xlane.xlu0 %1398
      %v1400 = vsel %vm1342, %v1329, -inf
      %1401 = vmax.xlane.f32.xlu0 %v1400
      %v1402 = vpop.xlane.xlu0 %1401
      %v1403 = vsel %vm1342, %v1330, -inf
      %1404 = vmax.xlane.f32.xlu0 %v1403
      %v1405 = vpop.xlane.xlu0 %1404
      %v1406 = vsel %vm1342, %v1331, -inf
      %1407 = vmax.xlane.f32.xlu0 %v1406
      %v1408 = vpop.xlane.xlu0 %1407
      %v1409 = vsel %vm1342, %v1332, -inf
      %1410 = vmax.xlane.f32.xlu0 %v1409
      %v1411 = vpop.xlane.xlu0 %1410
      %v1412 = vsel %vm1342, %v1333, -inf
      %1413 = vmax.xlane.f32.xlu0 %v1412
      %v1414 = vpop.xlane.xlu0 %1413
      %v1415 = vsel %vm1342, %v1334, -inf
      %1416 = vmax.xlane.f32.xlu0 %v1415
      %v1417 = vpop.xlane.xlu0 %1416
      %v1418 = vsel %vm1342, %v1335, -inf
      %1419 = vmax.xlane.f32.xlu0 %v1418
      %v1420 = vpop.xlane.xlu0 %1419
      %v1421 = vsel %vm1342, %v1336, -inf
      %1422 = vmax.xlane.f32.xlu0 %v1421
      %v1423 = vpop.xlane.xlu0 %1422
      %v1424 = vsel %vm1342, %v1337, -inf
      %1425 = vmax.xlane.f32.xlu0 %v1424
      %v1426 = vpop.xlane.xlu0 %1425
      %v1427 = vsel %vm1342, %v1338, -inf
      %1428 = vmax.xlane.f32.xlu0 %v1427
      %v1429 = vpop.xlane.xlu0 %1428
      %v1430 = vsel %vm1342, %v1339, -inf
      %1431 = vmax.xlane.f32.xlu0 %v1430
      %v1432 = vpop.xlane.xlu0 %1431
      %v1433 = vsel %vm1342, %v1340, -inf
      %1434 = vmax.xlane.f32.xlu0 %v1433
      %v1435 = vpop.xlane.xlu0 %1434
      %v1436 = vsel %vm1342, %v1341, -inf
      %1437 = vmax.xlane.f32.xlu0 %v1436
      %v1438 = vpop.xlane.xlu0 %1437
      %v1439 = vsub.f32 %v1310, %v1345
      %v1440 = vsub.f32 %v1311, %v1348
      %v1441 = vsub.f32 %v1312, %v1351
      %v1442 = vsub.f32 %v1313, %v1354
      %v1443 = vsub.f32 %v1314, %v1357
      %v1444 = vsub.f32 %v1315, %v1360
      %v1445 = vsub.f32 %v1316, %v1363
      %v1446 = vsub.f32 %v1317, %v1366
      %v1447 = vsub.f32 %v1318, %v1369
      %v1448 = vsub.f32 %v1319, %v1372
      %v1449 = vsub.f32 %v1320, %v1375
      %v1450 = vsub.f32 %v1321, %v1378
      %v1451 = vsub.f32 %v1322, %v1381
      %v1452 = vsub.f32 %v1323, %v1384
      %v1453 = vsub.f32 %v1324, %v1387
      %v1454 = vsub.f32 %v1325, %v1390
      %v1455 = vsub.f32 %v1326, %v1393
      %v1456 = vsub.f32 %v1327, %v1396
      %v1457 = vsub.f32 %v1328, %v1399
      %v1458 = vsub.f32 %v1329, %v1402
      %v1459 = vsub.f32 %v1330, %v1405
      %v1460 = vsub.f32 %v1331, %v1408
      %v1461 = vsub.f32 %v1332, %v1411
      %v1462 = vsub.f32 %v1333, %v1414
      %v1463 = vsub.f32 %v1334, %v1417
      %v1464 = vsub.f32 %v1335, %v1420
      %v1465 = vsub.f32 %v1336, %v1423
      %v1466 = vsub.f32 %v1337, %v1426
      %v1467 = vsub.f32 %v1338, %v1429
      %v1468 = vsub.f32 %v1339, %v1432
      %v1469 = vsub.f32 %v1340, %v1435
      %v1470 = vsub.f32 %v1341, %v1438
      %v1471 = vmul.f32 %v1439, 1.442695
      %v1472 = vpow.pop %v1471
      %v1473 = vmul.f32 %v1440, 1.442695
      %v1474 = vpow.pop %v1473
      %v1475 = vmul.f32 %v1441, 1.442695
      %v1476 = vpow.pop %v1475
      %v1477 = vmul.f32 %v1442, 1.442695
      %v1478 = vpow.pop %v1477
      %v1479 = vmul.f32 %v1443, 1.442695
      %v1480 = vpow.pop %v1479
      %v1481 = vmul.f32 %v1444, 1.442695
      %v1482 = vpow.pop %v1481
      %v1483 = vmul.f32 %v1445, 1.442695
      %v1484 = vpow.pop %v1483
      %v1485 = vmul.f32 %v1446, 1.442695
      %v1486 = vpow.pop %v1485
      %v1487 = vmul.f32 %v1447, 1.442695
      %v1488 = vpow.pop %v1487
      %v1489 = vmul.f32 %v1448, 1.442695
      %v1490 = vpow.pop %v1489
      %v1491 = vmul.f32 %v1449, 1.442695
      %v1492 = vpow.pop %v1491
      %v1493 = vmul.f32 %v1450, 1.442695
      %v1494 = vpow.pop %v1493
      %v1495 = vmul.f32 %v1451, 1.442695
      %v1496 = vpow.pop %v1495
      %v1497 = vmul.f32 %v1452, 1.442695
      %v1498 = vpow.pop %v1497
      %v1499 = vmul.f32 %v1453, 1.442695
      %v1500 = vpow.pop %v1499
      %v1501 = vmul.f32 %v1454, 1.442695
      %v1502 = vpow.pop %v1501
      %v1503 = vmul.f32 %v1455, 1.442695
      %v1504 = vpow.pop %v1503
      %v1505 = vmul.f32 %v1456, 1.442695
      %v1506 = vpow.pop %v1505
      %v1507 = vmul.f32 %v1457, 1.442695
      %v1508 = vpow.pop %v1507
      %v1509 = vmul.f32 %v1458, 1.442695
      %v1510 = vpow.pop %v1509
      %v1511 = vmul.f32 %v1459, 1.442695
      %v1512 = vpow.pop %v1511
      %v1513 = vmul.f32 %v1460, 1.442695
      %v1514 = vpow.pop %v1513
      %v1515 = vmul.f32 %v1461, 1.442695
      %v1516 = vpow.pop %v1515
      %v1517 = vmul.f32 %v1462, 1.442695
      %v1518 = vpow.pop %v1517
      %v1519 = vmul.f32 %v1463, 1.442695
      %v1520 = vpow.pop %v1519
      %v1521 = vmul.f32 %v1464, 1.442695
      %v1522 = vpow.pop %v1521
      %v1523 = vmul.f32 %v1465, 1.442695
      %v1524 = vpow.pop %v1523
      %v1525 = vmul.f32 %v1466, 1.442695
      %v1526 = vpow.pop %v1525
      %v1527 = vmul.f32 %v1467, 1.442695
      %v1528 = vpow.pop %v1527
      %v1529 = vmul.f32 %v1468, 1.442695
      %v1530 = vpow.pop %v1529
      %v1531 = vmul.f32 %v1469, 1.442695
      %v1532 = vpow.pop %v1531
      %v1533 = vmul.f32 %v1470, 1.442695
      %v1534 = vpow.pop %v1533
      %v1535 = vsel %vm1342, %v1472, 0.0
      %1536 = vadd.xlane.f32.xlu0 %v1535
      %v1537 = vpop.xlane.xlu0 %1536
      %v1538 = vsel %vm1342, %v1474, 0.0
      %1539 = vadd.xlane.f32.xlu0 %v1538
      %v1540 = vpop.xlane.xlu0 %1539
      %v1541 = vsel %vm1342, %v1476, 0.0
      %1542 = vadd.xlane.f32.xlu0 %v1541
      %v1543 = vpop.xlane.xlu0 %1542
      %v1544 = vsel %vm1342, %v1478, 0.0
      %1545 = vadd.xlane.f32.xlu0 %v1544
      %v1546 = vpop.xlane.xlu0 %1545
      %v1547 = vsel %vm1342, %v1480, 0.0
      %1548 = vadd.xlane.f32.xlu0 %v1547
      %v1549 = vpop.xlane.xlu0 %1548
      %v1550 = vsel %vm1342, %v1482, 0.0
      %1551 = vadd.xlane.f32.xlu0 %v1550
      %v1552 = vpop.xlane.xlu0 %1551
      %v1553 = vsel %vm1342, %v1484, 0.0
      %1554 = vadd.xlane.f32.xlu0 %v1553
      %v1555 = vpop.xlane.xlu0 %1554
      %v1556 = vsel %vm1342, %v1486, 0.0
      %1557 = vadd.xlane.f32.xlu0 %v1556
      %v1558 = vpop.xlane.xlu0 %1557
      %v1559 = vsel %vm1342, %v1488, 0.0
      %1560 = vadd.xlane.f32.xlu0 %v1559
      %v1561 = vpop.xlane.xlu0 %1560
      %v1562 = vsel %vm1342, %v1490, 0.0
      %1563 = vadd.xlane.f32.xlu0 %v1562
      %v1564 = vpop.xlane.xlu0 %1563
      %v1565 = vsel %vm1342, %v1492, 0.0
      %1566 = vadd.xlane.f32.xlu0 %v1565
      %v1567 = vpop.xlane.xlu0 %1566
      %v1568 = vsel %vm1342, %v1494, 0.0
      %1569 = vadd.xlane.f32.xlu0 %v1568
      %v1570 = vpop.xlane.xlu0 %1569
      %v1571 = vsel %vm1342, %v1496, 0.0
      %1572 = vadd.xlane.f32.xlu0 %v1571
      %v1573 = vpop.xlane.xlu0 %1572
      %v1574 = vsel %vm1342, %v1498, 0.0
      %1575 = vadd.xlane.f32.xlu0 %v1574
      %v1576 = vpop.xlane.xlu0 %1575
      %v1577 = vsel %vm1342, %v1500, 0.0
      %1578 = vadd.xlane.f32.xlu0 %v1577
      %v1579 = vpop.xlane.xlu0 %1578
      %v1580 = vsel %vm1342, %v1502, 0.0
      %1581 = vadd.xlane.f32.xlu0 %v1580
      %v1582 = vpop.xlane.xlu0 %1581
      %v1583 = vsel %vm1342, %v1504, 0.0
      %1584 = vadd.xlane.f32.xlu0 %v1583
      %v1585 = vpop.xlane.xlu0 %1584
      %v1586 = vsel %vm1342, %v1506, 0.0
      %1587 = vadd.xlane.f32.xlu0 %v1586
      %v1588 = vpop.xlane.xlu0 %1587
      %v1589 = vsel %vm1342, %v1508, 0.0
      %1590 = vadd.xlane.f32.xlu0 %v1589
      %v1591 = vpop.xlane.xlu0 %1590
      %v1592 = vsel %vm1342, %v1510, 0.0
      %1593 = vadd.xlane.f32.xlu0 %v1592
      %v1594 = vpop.xlane.xlu0 %1593
      %v1595 = vsel %vm1342, %v1512, 0.0
      %1596 = vadd.xlane.f32.xlu0 %v1595
      %v1597 = vpop.xlane.xlu0 %1596
      %v1598 = vsel %vm1342, %v1514, 0.0
      %1599 = vadd.xlane.f32.xlu0 %v1598
      %v1600 = vpop.xlane.xlu0 %1599
      %v1601 = vsel %vm1342, %v1516, 0.0
      %1602 = vadd.xlane.f32.xlu0 %v1601
      %v1603 = vpop.xlane.xlu0 %1602
      %v1604 = vsel %vm1342, %v1518, 0.0
      %1605 = vadd.xlane.f32.xlu0 %v1604
      %v1606 = vpop.xlane.xlu0 %1605
      %v1607 = vsel %vm1342, %v1520, 0.0
      %1608 = vadd.xlane.f32.xlu0 %v1607
      %v1609 = vpop.xlane.xlu0 %1608
      %v1610 = vsel %vm1342, %v1522, 0.0
      %1611 = vadd.xlane.f32.xlu0 %v1610
      %v1612 = vpop.xlane.xlu0 %1611
      %v1613 = vsel %vm1342, %v1524, 0.0
      %1614 = vadd.xlane.f32.xlu0 %v1613
      %v1615 = vpop.xlane.xlu0 %1614
      %v1616 = vsel %vm1342, %v1526, 0.0
      %1617 = vadd.xlane.f32.xlu0 %v1616
      %v1618 = vpop.xlane.xlu0 %1617
      %v1619 = vsel %vm1342, %v1528, 0.0
      %1620 = vadd.xlane.f32.xlu0 %v1619
      %v1621 = vpop.xlane.xlu0 %1620
      %v1622 = vsel %vm1342, %v1530, 0.0
      %1623 = vadd.xlane.f32.xlu0 %v1622
      %v1624 = vpop.xlane.xlu0 %1623
      %v1625 = vsel %vm1342, %v1532, 0.0
      %1626 = vadd.xlane.f32.xlu0 %v1625
      %v1627 = vpop.xlane.xlu0 %1626
      %v1628 = vsel %vm1342, %v1534, 0.0
      %1629 = vadd.xlane.f32.xlu0 %v1628
      %v1630 = vpop.xlane.xlu0 %1629
      %v1631 = vrcp.pop %v1537
      %v1632 = vrcp.pop %v1540
      %v1633 = vrcp.pop %v1543
      %v1634 = vrcp.pop %v1546
      %v1635 = vrcp.pop %v1549
      %v1636 = vrcp.pop %v1552
      %v1637 = vrcp.pop %v1555
      %v1638 = vrcp.pop %v1558
      %v1639 = vrcp.pop %v1561
      %v1640 = vrcp.pop %v1564
      %v1641 = vrcp.pop %v1567
      %v1642 = vrcp.pop %v1570
      %v1643 = vrcp.pop %v1573
      %v1644 = vrcp.pop %v1576
      %v1645 = vrcp.pop %v1579
      %v1646 = vrcp.pop %v1582
      %v1647 = vrcp.pop %v1585
      %v1648 = vrcp.pop %v1588
      %v1649 = vrcp.pop %v1591
      %v1650 = vrcp.pop %v1594
      %v1651 = vrcp.pop %v1597
      %v1652 = vrcp.pop %v1600
      %v1653 = vrcp.pop %v1603
      %v1654 = vrcp.pop %v1606
      %v1655 = vrcp.pop %v1609
      %v1656 = vrcp.pop %v1612
      %v1657 = vrcp.pop %v1615
      %v1658 = vrcp.pop %v1618
      %v1659 = vrcp.pop %v1621
      %v1660 = vrcp.pop %v1624
      %v1661 = vrcp.pop %v1627
      %v1662 = vrcp.pop %v1630
      %v1663 = vmul.f32 %v1472, %v1631
      %v1664 = vmul.f32 %v1474, %v1632
      %v1665 = vmul.f32 %v1476, %v1633
      %v1666 = vmul.f32 %v1478, %v1634
      %v1667 = vmul.f32 %v1480, %v1635
      %v1668 = vmul.f32 %v1482, %v1636
      %v1669 = vmul.f32 %v1484, %v1637
      %v1670 = vmul.f32 %v1486, %v1638
      %v1671 = vmul.f32 %v1488, %v1639
      %v1672 = vmul.f32 %v1490, %v1640
      %v1673 = vmul.f32 %v1492, %v1641
      %v1674 = vmul.f32 %v1494, %v1642
      %v1675 = vmul.f32 %v1496, %v1643
      %v1676 = vmul.f32 %v1498, %v1644
      %v1677 = vmul.f32 %v1500, %v1645
      %v1678 = vmul.f32 %v1502, %v1646
      %v1679 = vmul.f32 %v1504, %v1647
      %v1680 = vmul.f32 %v1506, %v1648
      %v1681 = vmul.f32 %v1508, %v1649
      %v1682 = vmul.f32 %v1510, %v1650
      %v1683 = vmul.f32 %v1512, %v1651
      %v1684 = vmul.f32 %v1514, %v1652
      %v1685 = vmul.f32 %v1516, %v1653
      %v1686 = vmul.f32 %v1518, %v1654
      %v1687 = vmul.f32 %v1520, %v1655
      %v1688 = vmul.f32 %v1522, %v1656
      %v1689 = vmul.f32 %v1524, %v1657
      %v1690 = vmul.f32 %v1526, %v1658
      %v1691 = vmul.f32 %v1528, %v1659
      %v1692 = vmul.f32 %v1530, %v1660
      %v1693 = vmul.f32 %v1532, %v1661
      %v1694 = vmul.f32 %v1534, %v1662
      %v1695 = vpack.c.bf16 %v1664, %v1663
      %v1696 = vpack.c.bf16 %v1666, %v1665
      %v1697 = vpack.c.bf16 %v1668, %v1667
      %v1698 = vpack.c.bf16 %v1670, %v1669
      %v1699 = vpack.c.bf16 %v1672, %v1671
      %v1700 = vpack.c.bf16 %v1674, %v1673
      %v1701 = vpack.c.bf16 %v1676, %v1675
      %v1702 = vpack.c.bf16 %v1678, %v1677
      %v1703 = vpack.c.bf16 %v1680, %v1679
      %v1704 = vpack.c.bf16 %v1682, %v1681
      %v1705 = vpack.c.bf16 %v1684, %v1683
      %v1706 = vpack.c.bf16 %v1686, %v1685
      %v1707 = vpack.c.bf16 %v1688, %v1687
      %v1708 = vpack.c.bf16 %v1690, %v1689
      %v1709 = vpack.c.bf16 %v1692, %v1691
      %v1710 = vpack.c.bf16 %v1694, %v1693
      %1711 = vrot.lane.b32.xlu0 %v485, 64
      %v1712 = vpop.permute.xlu0 %1711
      %v1715 = vsel %vm1342, %v1695, 0
      %1717 = vmatprep.subr.bf16.mxu0 0
      %1718 = vmatpush1.bf16.msra.mxu0 %v1712
      %1719 = vmatprep.subr.bf16.mxu0 0
      %1720 = vmatpush1.bf16.msra.mxu0 0
      %1721 = vmatprep.subr.bf16.mxu0 0
      %1722 = vmatpush1.bf16.msra.mxu0 0
      %1723 = vmatprep.subr.bf16.mxu0 0
      %1724 = vmatpush1.bf16.msra.mxu0 0
      %1725 = vmatprep.subr.bf16.mxu0 0
      %1726 = vmatpush1.bf16.msra.mxu0 0
      %1727 = vmatprep.subr.bf16.mxu0 0
      %1728 = vmatpush1.bf16.msra.mxu0 0
      %1729 = vmatprep.subr.bf16.mxu0 0
      %1730 = vmatpush1.bf16.msra.mxu0 0
      %1731 = vmatprep.subr.bf16.mxu0 0
      %1732 = vmatpush1.bf16.msra.mxu0 0
      %1733 = vmatprep.subr.bf16.mxu0 0
      %1734 = vmatpush1.bf16.msra.mxu0 0
      %1735 = vmatprep.subr.bf16.mxu0 0
      %1736 = vmatpush1.bf16.msra.mxu0 0
      %1737 = vmatprep.subr.bf16.mxu0 0
      %1738 = vmatpush1.bf16.msra.mxu0 0
      %1739 = vmatprep.subr.bf16.mxu0 0
      %1740 = vmatpush1.bf16.msra.mxu0 0
      %1741 = vmatprep.subr.bf16.mxu0 0
      %1742 = vmatpush1.bf16.msra.mxu0 0
      %1743 = vmatprep.subr.bf16.mxu0 0
      %1744 = vmatpush1.bf16.msra.mxu0 0
      %1745 = vmatprep.subr.bf16.mxu0 0
      %1746 = vmatpush1.bf16.msra.mxu0 0
      %1747 = vmatprep.subr.bf16.mxu0 0
      %1748 = vmatpush1.bf16.msra.mxu0 0
      %1749 = vmatprep.mubr.bf16.mxu0 0
      %1750 = vmatmul.mubr.bf16.gmra.mrb[0].mxu0 %v1715
      %v1751 = vpop.f32.mrb[0].mxu0
      %v1752 = vadd.f32 0.0, %v1751
      %v1753 = vpop.f32.mrb[0].mxu0
      %v1754 = vpop.f32.mrb[0].mxu0
      %v1755 = vadd.f32 0.0, %v1754
      %v1756 = vpop.f32.mrb[0].mxu0
      %1757 = vdwg.mxu0
      %1758 = vrot.lane.b32.xlu0 %v486, 64
      %v1759 = vpop.permute.xlu0 %1758
      %v1762 = vsel %vm1342, %v1696, 0
      %1764 = vmatprep.subr.bf16.mxu0 0
      %1765 = vmatpush1.bf16.msra.mxu0 %v1759
      %1766 = vmatprep.subr.bf16.mxu0 0
      %1767 = vmatpush1.bf16.msra.mxu0 0
      %1768 = vmatprep.subr.bf16.mxu0 0
      %1769 = vmatpush1.bf16.msra.mxu0 0
      %1770 = vmatprep.subr.bf16.mxu0 0
      %1771 = vmatpush1.bf16.msra.mxu0 0
      %1772 = vmatprep.subr.bf16.mxu0 0
      %1773 = vmatpush1.bf16.msra.mxu0 0
      %1774 = vmatprep.subr.bf16.mxu0 0
      %1775 = vmatpush1.bf16.msra.mxu0 0
      %1776 = vmatprep.subr.bf16.mxu0 0
      %1777 = vmatpush1.bf16.msra.mxu0 0
      %1778 = vmatprep.subr.bf16.mxu0 0
      %1779 = vmatpush1.bf16.msra.mxu0 0
      %1780 = vmatprep.subr.bf16.mxu0 0
      %1781 = vmatpush1.bf16.msra.mxu0 0
      %1782 = vmatprep.subr.bf16.mxu0 0
      %1783 = vmatpush1.bf16.msra.mxu0 0
      %1784 = vmatprep.subr.bf16.mxu0 0
      %1785 = vmatpush1.bf16.msra.mxu0 0
      %1786 = vmatprep.subr.bf16.mxu0 0
      %1787 = vmatpush1.bf16.msra.mxu0 0
      %1788 = vmatprep.subr.bf16.mxu0 0
      %1789 = vmatpush1.bf16.msra.mxu0 0
      %1790 = vmatprep.subr.bf16.mxu0 0
      %1791 = vmatpush1.bf16.msra.mxu0 0
      %1792 = vmatprep.subr.bf16.mxu0 0
      %1793 = vmatpush1.bf16.msra.mxu0 0
      %1794 = vmatprep.subr.bf16.mxu0 0
      %1795 = vmatpush1.bf16.msra.mxu0 0
      %1796 = vmatprep.mubr.bf16.mxu0 0
      %1797 = vmatmul.mubr.bf16.gmra.mrb[0].mxu0 %v1762
      %v1798 = vpop.f32.mrb[0].mxu0
      %v1799 = vadd.f32 0.0, %v1798
      %v1800 = vpop.f32.mrb[0].mxu0
      %v1801 = vpop.f32.mrb[0].mxu0
      %v1802 = vadd.f32 0.0, %v1801
      %v1803 = vpop.f32.mrb[0].mxu0
      %1804 = vdwg.mxu0
      %1805 = vrot.lane.b32.xlu0 %v487, 64
      %v1806 = vpop.permute.xlu0 %1805
      %v1809 = vsel %vm1342, %v1697, 0
      %1811 = vmatprep.subr.bf16.mxu0 0
      %1812 = vmatpush1.bf16.msra.mxu0 %v1806
      %1813 = vmatprep.subr.bf16.mxu0 0
      %1814 = vmatpush1.bf16.msra.mxu0 0
      %1815 = vmatprep.subr.bf16.mxu0 0
      %1816 = vmatpush1.bf16.msra.mxu0 0
      %1817 = vmatprep.subr.bf16.mxu0 0
      %1818 = vmatpush1.bf16.msra.mxu0 0
      %1819 = vmatprep.subr.bf16.mxu0 0
      %1820 = vmatpush1.bf16.msra.mxu0 0
      %1821 = vmatprep.subr.bf16.mxu0 0
      %1822 = vmatpush1.bf16.msra.mxu0 0
      %1823 = vmatprep.subr.bf16.mxu0 0
      %1824 = vmatpush1.bf16.msra.mxu0 0
      %1825 = vmatprep.subr.bf16.mxu0 0
      %1826 = vmatpush1.bf16.msra.mxu0 0
      %1827 = vmatprep.subr.bf16.mxu0 0
      %1828 = vmatpush1.bf16.msra.mxu0 0
      %1829 = vmatprep.subr.bf16.mxu0 0
      %1830 = vmatpush1.bf16.msra.mxu0 0
      %1831 = vmatprep.subr.bf16.mxu0 0
      %1832 = vmatpush1.bf16.msra.mxu0 0
      %1833 = vmatprep.subr.bf16.mxu0 0
      %1834 = vmatpush1.bf16.msra.mxu0 0
      %1835 = vmatprep.subr.bf16.mxu0 0
      %1836 = vmatpush1.bf16.msra.mxu0 0
      %1837 = vmatprep.subr.bf16.mxu0 0
      %1838 = vmatpush1.bf16.msra.mxu0 0
      %1839 = vmatprep.subr.bf16.mxu0 0
      %1840 = vmatpush1.bf16.msra.mxu0 0
      %1841 = vmatprep.subr.bf16.mxu0 0
      %1842 = vmatpush1.bf16.msra.mxu0 0
      %1843 = vmatprep.mubr.bf16.mxu0 0
      %1844 = vmatmul.mubr.bf16.gmra.mrb[0].mxu0 %v1809
      %v1845 = vpop.f32.mrb[0].mxu0
      %v1846 = vadd.f32 0.0, %v1845
      %v1847 = vpop.f32.mrb[0].mxu0
      %v1848 = vpop.f32.mrb[0].mxu0
      %v1849 = vadd.f32 0.0, %v1848
      %v1850 = vpop.f32.mrb[0].mxu0
      %1851 = vdwg.mxu0
      %1852 = vrot.lane.b32.xlu0 %v488, 64
      %v1853 = vpop.permute.xlu0 %1852
      %v1856 = vsel %vm1342, %v1698, 0
      %1858 = vmatprep.subr.bf16.mxu0 0
      %1859 = vmatpush1.bf16.msra.mxu0 %v1853
      %1860 = vmatprep.subr.bf16.mxu0 0
      %1861 = vmatpush1.bf16.msra.mxu0 0
      %1862 = vmatprep.subr.bf16.mxu0 0
      %1863 = vmatpush1.bf16.msra.mxu0 0
      %1864 = vmatprep.subr.bf16.mxu0 0
      %1865 = vmatpush1.bf16.msra.mxu0 0
      %1866 = vmatprep.subr.bf16.mxu0 0
      %1867 = vmatpush1.bf16.msra.mxu0 0
      %1868 = vmatprep.subr.bf16.mxu0 0
      %1869 = vmatpush1.bf16.msra.mxu0 0
      %1870 = vmatprep.subr.bf16.mxu0 0
      %1871 = vmatpush1.bf16.msra.mxu0 0
      %1872 = vmatprep.subr.bf16.mxu0 0
      %1873 = vmatpush1.bf16.msra.mxu0 0
      %1874 = vmatprep.subr.bf16.mxu0 0
      %1875 = vmatpush1.bf16.msra.mxu0 0
      %1876 = vmatprep.subr.bf16.mxu0 0
      %1877 = vmatpush1.bf16.msra.mxu0 0
      %1878 = vmatprep.subr.bf16.mxu0 0
      %1879 = vmatpush1.bf16.msra.mxu0 0
      %1880 = vmatprep.subr.bf16.mxu0 0
      %1881 = vmatpush1.bf16.msra.mxu0 0
      %1882 = vmatprep.subr.bf16.mxu0 0
      %1883 = vmatpush1.bf16.msra.mxu0 0
      %1884 = vmatprep.subr.bf16.mxu0 0
      %1885 = vmatpush1.bf16.msra.mxu0 0
      %1886 = vmatprep.subr.bf16.mxu0 0
      %1887 = vmatpush1.bf16.msra.mxu0 0
      %1888 = vmatprep.subr.bf16.mxu0 0
      %1889 = vmatpush1.bf16.msra.mxu0 0
      %1890 = vmatprep.mubr.bf16.mxu0 0
      %1891 = vmatmul.mubr.bf16.gmra.mrb[0].mxu0 %v1856
      %v1892 = vpop.f32.mrb[0].mxu0
      %v1893 = vadd.f32 0.0, %v1892
      %v1894 = vpop.f32.mrb[0].mxu0
      %v1895 = vpop.f32.mrb[0].mxu0
      %v1896 = vadd.f32 0.0, %v1895
      %v1897 = vpop.f32.mrb[0].mxu0
      %1898 = vdwg.mxu0
      %1899 = vrot.lane.b32.xlu0 %v489, 64
      %v1900 = vpop.permute.xlu0 %1899
      %v1903 = vsel %vm1342, %v1699, 0
      %1905 = vmatprep.subr.bf16.mxu0 0
      %1906 = vmatpush1.bf16.msra.mxu0 %v1900
      %1907 = vmatprep.subr.bf16.mxu0 0
      %1908 = vmatpush1.bf16.msra.mxu0 0
      %1909 = vmatprep.subr.bf16.mxu0 0
      %1910 = vmatpush1.bf16.msra.mxu0 0
      %1911 = vmatprep.subr.bf16.mxu0 0
      %1912 = vmatpush1.bf16.msra.mxu0 0
      %1913 = vmatprep.subr.bf16.mxu0 0
      %1914 = vmatpush1.bf16.msra.mxu0 0
      %1915 = vmatprep.subr.bf16.mxu0 0
      %1916 = vmatpush1.bf16.msra.mxu0 0
      %1917 = vmatprep.subr.bf16.mxu0 0
      %1918 = vmatpush1.bf16.msra.mxu0 0
      %1919 = vmatprep.subr.bf16.mxu0 0
      %1920 = vmatpush1.bf16.msra.mxu0 0
      %1921 = vmatprep.subr.bf16.mxu0 0
      %1922 = vmatpush1.bf16.msra.mxu0 0
      %1923 = vmatprep.subr.bf16.mxu0 0
      %1924 = vmatpush1.bf16.msra.mxu0 0
      %1925 = vmatprep.subr.bf16.mxu0 0
      %1926 = vmatpush1.bf16.msra.mxu0 0
      %1927 = vmatprep.subr.bf16.mxu0 0
      %1928 = vmatpush1.bf16.msra.mxu0 0
      %1929 = vmatprep.subr.bf16.mxu0 0
      %1930 = vmatpush1.bf16.msra.mxu0 0
      %1931 = vmatprep.subr.bf16.mxu0 0
      %1932 = vmatpush1.bf16.msra.mxu0 0
      %1933 = vmatprep.subr.bf16.mxu0 0
      %1934 = vmatpush1.bf16.msra.mxu0 0
      %1935 = vmatprep.subr.bf16.mxu0 0
      %1936 = vmatpush1.bf16.msra.mxu0 0
      %1937 = vmatprep.mubr.bf16.mxu0 0
      %1938 = vmatmul.mubr.bf16.gmra.mrb[0].mxu0 %v1903
      %v1939 = vpop.f32.mrb[0].mxu0
      %v1940 = vadd.f32 0.0, %v1939
      %v1941 = vpop.f32.mrb[0].mxu0
      %v1942 = vpop.f32.mrb[0].mxu0
      %v1943 = vadd.f32 0.0, %v1942
      %v1944 = vpop.f32.mrb[0].mxu0
      %1945 = vdwg.mxu0
      %1946 = vrot.lane.b32.xlu0 %v490, 64
      %v1947 = vpop.permute.xlu0 %1946
      %v1950 = vsel %vm1342, %v1700, 0
      %1952 = vmatprep.subr.bf16.mxu0 0
      %1953 = vmatpush1.bf16.msra.mxu0 %v1947
      %1954 = vmatprep.subr.bf16.mxu0 0
      %1955 = vmatpush1.bf16.msra.mxu0 0
      %1956 = vmatprep.subr.bf16.mxu0 0
      %1957 = vmatpush1.bf16.msra.mxu0 0
      %1958 = vmatprep.subr.bf16.mxu0 0
      %1959 = vmatpush1.bf16.msra.mxu0 0
      %1960 = vmatprep.subr.bf16.mxu0 0
      %1961 = vmatpush1.bf16.msra.mxu0 0
      %1962 = vmatprep.subr.bf16.mxu0 0
      %1963 = vmatpush1.bf16.msra.mxu0 0
      %1964 = vmatprep.subr.bf16.mxu0 0
      %1965 = vmatpush1.bf16.msra.mxu0 0
      %1966 = vmatprep.subr.bf16.mxu0 0
      %1967 = vmatpush1.bf16.msra.mxu0 0
      %1968 = vmatprep.subr.bf16.mxu0 0
      %1969 = vmatpush1.bf16.msra.mxu0 0
      %1970 = vmatprep.subr.bf16.mxu0 0
      %1971 = vmatpush1.bf16.msra.mxu0 0
      %1972 = vmatprep.subr.bf16.mxu0 0
      %1973 = vmatpush1.bf16.msra.mxu0 0
      %1974 = vmatprep.subr.bf16.mxu0 0
      %1975 = vmatpush1.bf16.msra.mxu0 0
      %1976 = vmatprep.subr.bf16.mxu0 0
      %1977 = vmatpush1.bf16.msra.mxu0 0
      %1978 = vmatprep.subr.bf16.mxu0 0
      %1979 = vmatpush1.bf16.msra.mxu0 0
      %1980 = vmatprep.subr.bf16.mxu0 0
      %1981 = vmatpush1.bf16.msra.mxu0 0
      %1982 = vmatprep.subr.bf16.mxu0 0
      %1983 = vmatpush1.bf16.msra.mxu0 0
      %1984 = vmatprep.mubr.bf16.mxu0 0
      %1985 = vmatmul.mubr.bf16.gmra.mrb[0].mxu0 %v1950
      %v1986 = vpop.f32.mrb[0].mxu0
      %v1987 = vadd.f32 0.0, %v1986
      %v1988 = vpop.f32.mrb[0].mxu0
      %v1989 = vpop.f32.mrb[0].mxu0
      %v1990 = vadd.f32 0.0, %v1989
      %v1991 = vpop.f32.mrb[0].mxu0
      %1992 = vdwg.mxu0
      %1993 = vrot.lane.b32.xlu0 %v491, 64
      %v1994 = vpop.permute.xlu0 %1993
      %v1997 = vsel %vm1342, %v1701, 0
      %1999 = vmatprep.subr.bf16.mxu0 0
      %2000 = vmatpush1.bf16.msra.mxu0 %v1994
      %2001 = vmatprep.subr.bf16.mxu0 0
      %2002 = vmatpush1.bf16.msra.mxu0 0
      %2003 = vmatprep.subr.bf16.mxu0 0
      %2004 = vmatpush1.bf16.msra.mxu0 0
      %2005 = vmatprep.subr.bf16.mxu0 0
      %2006 = vmatpush1.bf16.msra.mxu0 0
      %2007 = vmatprep.subr.bf16.mxu0 0
      %2008 = vmatpush1.bf16.msra.mxu0 0
      %2009 = vmatprep.subr.bf16.mxu0 0
      %2010 = vmatpush1.bf16.msra.mxu0 0
      %2011 = vmatprep.subr.bf16.mxu0 0
      %2012 = vmatpush1.bf16.msra.mxu0 0
      %2013 = vmatprep.subr.bf16.mxu0 0
      %2014 = vmatpush1.bf16.msra.mxu0 0
      %2015 = vmatprep.subr.bf16.mxu0 0
      %2016 = vmatpush1.bf16.msra.mxu0 0
      %2017 = vmatprep.subr.bf16.mxu0 0
      %2018 = vmatpush1.bf16.msra.mxu0 0
      %2019 = vmatprep.subr.bf16.mxu0 0
      %2020 = vmatpush1.bf16.msra.mxu0 0
      %2021 = vmatprep.subr.bf16.mxu0 0
      %2022 = vmatpush1.bf16.msra.mxu0 0
      %2023 = vmatprep.subr.bf16.mxu0 0
      %2024 = vmatpush1.bf16.msra.mxu0 0
      %2025 = vmatprep.subr.bf16.mxu0 0
      %2026 = vmatpush1.bf16.msra.mxu0 0
      %2027 = vmatprep.subr.bf16.mxu0 0
      %2028 = vmatpush1.bf16.msra.mxu0 0
      %2029 = vmatprep.subr.bf16.mxu0 0
      %2030 = vmatpush1.bf16.msra.mxu0 0
      %2031 = vmatprep.mubr.bf16.mxu0 0
      %2032 = vmatmul.mubr.bf16.gmra.mrb[0].mxu0 %v1997
      %v2033 = vpop.f32.mrb[0].mxu0
      %v2034 = vadd.f32 0.0, %v2033
      %v2035 = vpop.f32.mrb[0].mxu0
      %v2036 = vpop.f32.mrb[0].mxu0
      %v2037 = vadd.f32 0.0, %v2036
      %v2038 = vpop.f32.mrb[0].mxu0
      %2039 = vdwg.mxu0
      %2040 = vrot.lane.b32.xlu0 %v492, 64
      %v2041 = vpop.permute.xlu0 %2040
      %v2044 = vsel %vm1342, %v1702, 0
      %2046 = vmatprep.subr.bf16.mxu0 0
      %2047 = vmatpush1.bf16.msra.mxu0 %v2041
      %2048 = vmatprep.subr.bf16.mxu0 0
      %2049 = vmatpush1.bf16.msra.mxu0 0
      %2050 = vmatprep.subr.bf16.mxu0 0
      %2051 = vmatpush1.bf16.msra.mxu0 0
      %2052 = vmatprep.subr.bf16.mxu0 0
      %2053 = vmatpush1.bf16.msra.mxu0 0
      %2054 = vmatprep.subr.bf16.mxu0 0
      %2055 = vmatpush1.bf16.msra.mxu0 0
      %2056 = vmatprep.subr.bf16.mxu0 0
      %2057 = vmatpush1.bf16.msra.mxu0 0
      %2058 = vmatprep.subr.bf16.mxu0 0
      %2059 = vmatpush1.bf16.msra.mxu0 0
      %2060 = vmatprep.subr.bf16.mxu0 0
      %2061 = vmatpush1.bf16.msra.mxu0 0
      %2062 = vmatprep.subr.bf16.mxu0 0
      %2063 = vmatpush1.bf16.msra.mxu0 0
      %2064 = vmatprep.subr.bf16.mxu0 0
      %2065 = vmatpush1.bf16.msra.mxu0 0
      %2066 = vmatprep.subr.bf16.mxu0 0
      %2067 = vmatpush1.bf16.msra.mxu0 0
      %2068 = vmatprep.subr.bf16.mxu0 0
      %2069 = vmatpush1.bf16.msra.mxu0 0
      %2070 = vmatprep.subr.bf16.mxu0 0
      %2071 = vmatpush1.bf16.msra.mxu0 0
      %2072 = vmatprep.subr.bf16.mxu0 0
      %2073 = vmatpush1.bf16.msra.mxu0 0
      %2074 = vmatprep.subr.bf16.mxu0 0
      %2075 = vmatpush1.bf16.msra.mxu0 0
      %2076 = vmatprep.subr.bf16.mxu0 0
      %2077 = vmatpush1.bf16.msra.mxu0 0
      %2078 = vmatprep.mubr.bf16.mxu0 0
      %2079 = vmatmul.mubr.bf16.gmra.mrb[0].mxu0 %v2044
      %v2080 = vpop.f32.mrb[0].mxu0
      %v2081 = vadd.f32 0.0, %v2080
      %v2082 = vpop.f32.mrb[0].mxu0
      %v2083 = vpop.f32.mrb[0].mxu0
      %v2084 = vadd.f32 0.0, %v2083
      %v2085 = vpop.f32.mrb[0].mxu0
      %2086 = vdwg.mxu0
      %2087 = vrot.lane.b32.xlu0 %v493, 64
      %v2088 = vpop.permute.xlu0 %2087
      %v2091 = vsel %vm1342, %v1703, 0
      %2093 = vmatprep.subr.bf16.mxu0 0
      %2094 = vmatpush1.bf16.msra.mxu0 %v2088
      %2095 = vmatprep.subr.bf16.mxu0 0
      %2096 = vmatpush1.bf16.msra.mxu0 0
      %2097 = vmatprep.subr.bf16.mxu0 0
      %2098 = vmatpush1.bf16.msra.mxu0 0
      %2099 = vmatprep.subr.bf16.mxu0 0
      %2100 = vmatpush1.bf16.msra.mxu0 0
      %2101 = vmatprep.subr.bf16.mxu0 0
      %2102 = vmatpush1.bf16.msra.mxu0 0
      %2103 = vmatprep.subr.bf16.mxu0 0
      %2104 = vmatpush1.bf16.msra.mxu0 0
      %2105 = vmatprep.subr.bf16.mxu0 0
      %2106 = vmatpush1.bf16.msra.mxu0 0
      %2107 = vmatprep.subr.bf16.mxu0 0
      %2108 = vmatpush1.bf16.msra.mxu0 0
      %2109 = vmatprep.subr.bf16.mxu0 0
      %2110 = vmatpush1.bf16.msra.mxu0 0
      %2111 = vmatprep.subr.bf16.mxu0 0
      %2112 = vmatpush1.bf16.msra.mxu0 0
      %2113 = vmatprep.subr.bf16.mxu0 0
      %2114 = vmatpush1.bf16.msra.mxu0 0
      %2115 = vmatprep.subr.bf16.mxu0 0
      %2116 = vmatpush1.bf16.msra.mxu0 0
      %2117 = vmatprep.subr.bf16.mxu0 0
      %2118 = vmatpush1.bf16.msra.mxu0 0
      %2119 = vmatprep.subr.bf16.mxu0 0
      %2120 = vmatpush1.bf16.msra.mxu0 0
      %2121 = vmatprep.subr.bf16.mxu0 0
      %2122 = vmatpush1.bf16.msra.mxu0 0
      %2123 = vmatprep.subr.bf16.mxu0 0
      %2124 = vmatpush1.bf16.msra.mxu0 0
      %2125 = vmatprep.mubr.bf16.mxu0 0
      %2126 = vmatmul.mubr.bf16.gmra.mrb[0].mxu0 %v2091
      %v2127 = vpop.f32.mrb[0].mxu0
      %v2128 = vadd.f32 0.0, %v2127
      %v2129 = vpop.f32.mrb[0].mxu0
      %v2130 = vpop.f32.mrb[0].mxu0
      %v2131 = vadd.f32 0.0, %v2130
      %v2132 = vpop.f32.mrb[0].mxu0
      %2133 = vdwg.mxu0
      %2134 = vrot.lane.b32.xlu0 %v494, 64
      %v2135 = vpop.permute.xlu0 %2134
      %v2138 = vsel %vm1342, %v1704, 0
      %2140 = vmatprep.subr.bf16.mxu0 0
      %2141 = vmatpush1.bf16.msra.mxu0 %v2135
      %2142 = vmatprep.subr.bf16.mxu0 0
      %2143 = vmatpush1.bf16.msra.mxu0 0
      %2144 = vmatprep.subr.bf16.mxu0 0
      %2145 = vmatpush1.bf16.msra.mxu0 0
      %2146 = vmatprep.subr.bf16.mxu0 0
      %2147 = vmatpush1.bf16.msra.mxu0 0
      %2148 = vmatprep.subr.bf16.mxu0 0
      %2149 = vmatpush1.bf16.msra.mxu0 0
      %2150 = vmatprep.subr.bf16.mxu0 0
      %2151 = vmatpush1.bf16.msra.mxu0 0
      %2152 = vmatprep.subr.bf16.mxu0 0
      %2153 = vmatpush1.bf16.msra.mxu0 0
      %2154 = vmatprep.subr.bf16.mxu0 0
      %2155 = vmatpush1.bf16.msra.mxu0 0
      %2156 = vmatprep.subr.bf16.mxu0 0
      %2157 = vmatpush1.bf16.msra.mxu0 0
      %2158 = vmatprep.subr.bf16.mxu0 0
      %2159 = vmatpush1.bf16.msra.mxu0 0
      %2160 = vmatprep.subr.bf16.mxu0 0
      %2161 = vmatpush1.bf16.msra.mxu0 0
      %2162 = vmatprep.subr.bf16.mxu0 0
      %2163 = vmatpush1.bf16.msra.mxu0 0
      %2164 = vmatprep.subr.bf16.mxu0 0
      %2165 = vmatpush1.bf16.msra.mxu0 0
      %2166 = vmatprep.subr.bf16.mxu0 0
      %2167 = vmatpush1.bf16.msra.mxu0 0
      %2168 = vmatprep.subr.bf16.mxu0 0
      %2169 = vmatpush1.bf16.msra.mxu0 0
      %2170 = vmatprep.subr.bf16.mxu0 0
      %2171 = vmatpush1.bf16.msra.mxu0 0
      %2172 = vmatprep.mubr.bf16.mxu0 0
      %2173 = vmatmul.mubr.bf16.gmra.mrb[0].mxu0 %v2138
      %v2174 = vpop.f32.mrb[0].mxu0
      %v2175 = vadd.f32 0.0, %v2174
      %v2176 = vpop.f32.mrb[0].mxu0
      %v2177 = vpop.f32.mrb[0].mxu0
      %v2178 = vadd.f32 0.0, %v2177
      %v2179 = vpop.f32.mrb[0].mxu0
      %2180 = vdwg.mxu0
      %2181 = vrot.lane.b32.xlu0 %v495, 64
      %v2182 = vpop.permute.xlu0 %2181
      %v2185 = vsel %vm1342, %v1705, 0
      %2187 = vmatprep.subr.bf16.mxu0 0
      %2188 = vmatpush1.bf16.msra.mxu0 %v2182
      %2189 = vmatprep.subr.bf16.mxu0 0
      %2190 = vmatpush1.bf16.msra.mxu0 0
      %2191 = vmatprep.subr.bf16.mxu0 0
      %2192 = vmatpush1.bf16.msra.mxu0 0
      %2193 = vmatprep.subr.bf16.mxu0 0
      %2194 = vmatpush1.bf16.msra.mxu0 0
      %2195 = vmatprep.subr.bf16.mxu0 0
      %2196 = vmatpush1.bf16.msra.mxu0 0
      %2197 = vmatprep.subr.bf16.mxu0 0
      %2198 = vmatpush1.bf16.msra.mxu0 0
      %2199 = vmatprep.subr.bf16.mxu0 0
      %2200 = vmatpush1.bf16.msra.mxu0 0
      %2201 = vmatprep.subr.bf16.mxu0 0
      %2202 = vmatpush1.bf16.msra.mxu0 0
      %2203 = vmatprep.subr.bf16.mxu0 0
      %2204 = vmatpush1.bf16.msra.mxu0 0
      %2205 = vmatprep.subr.bf16.mxu0 0
      %2206 = vmatpush1.bf16.msra.mxu0 0
      %2207 = vmatprep.subr.bf16.mxu0 0
      %2208 = vmatpush1.bf16.msra.mxu0 0
      %2209 = vmatprep.subr.bf16.mxu0 0
      %2210 = vmatpush1.bf16.msra.mxu0 0
      %2211 = vmatprep.subr.bf16.mxu0 0
      %2212 = vmatpush1.bf16.msra.mxu0 0
      %2213 = vmatprep.subr.bf16.mxu0 0
      %2214 = vmatpush1.bf16.msra.mxu0 0
      %2215 = vmatprep.subr.bf16.mxu0 0
      %2216 = vmatpush1.bf16.msra.mxu0 0
      %2217 = vmatprep.subr.bf16.mxu0 0
      %2218 = vmatpush1.bf16.msra.mxu0 0
      %2219 = vmatprep.mubr.bf16.mxu0 0
      %2220 = vmatmul.mubr.bf16.gmra.mrb[0].mxu0 %v2185
      %v2221 = vpop.f32.mrb[0].mxu0
      %v2222 = vadd.f32 0.0, %v2221
      %v2223 = vpop.f32.mrb[0].mxu0
      %v2224 = vpop.f32.mrb[0].mxu0
      %v2225 = vadd.f32 0.0, %v2224
      %v2226 = vpop.f32.mrb[0].mxu0
      %2227 = vdwg.mxu0
      %2228 = vrot.lane.b32.xlu0 %v496, 64
      %v2229 = vpop.permute.xlu0 %2228
      %v2232 = vsel %vm1342, %v1706, 0
      %2234 = vmatprep.subr.bf16.mxu0 0
      %2235 = vmatpush1.bf16.msra.mxu0 %v2229
      %2236 = vmatprep.subr.bf16.mxu0 0
      %2237 = vmatpush1.bf16.msra.mxu0 0
      %2238 = vmatprep.subr.bf16.mxu0 0
      %2239 = vmatpush1.bf16.msra.mxu0 0
      %2240 = vmatprep.subr.bf16.mxu0 0
      %2241 = vmatpush1.bf16.msra.mxu0 0
      %2242 = vmatprep.subr.bf16.mxu0 0
      %2243 = vmatpush1.bf16.msra.mxu0 0
      %2244 = vmatprep.subr.bf16.mxu0 0
      %2245 = vmatpush1.bf16.msra.mxu0 0
      %2246 = vmatprep.subr.bf16.mxu0 0
      %2247 = vmatpush1.bf16.msra.mxu0 0
      %2248 = vmatprep.subr.bf16.mxu0 0
      %2249 = vmatpush1.bf16.msra.mxu0 0
      %2250 = vmatprep.subr.bf16.mxu0 0
      %2251 = vmatpush1.bf16.msra.mxu0 0
      %2252 = vmatprep.subr.bf16.mxu0 0
      %2253 = vmatpush1.bf16.msra.mxu0 0
      %2254 = vmatprep.subr.bf16.mxu0 0
      %2255 = vmatpush1.bf16.msra.mxu0 0
      %2256 = vmatprep.subr.bf16.mxu0 0
      %2257 = vmatpush1.bf16.msra.mxu0 0
      %2258 = vmatprep.subr.bf16.mxu0 0
      %2259 = vmatpush1.bf16.msra.mxu0 0
      %2260 = vmatprep.subr.bf16.mxu0 0
      %2261 = vmatpush1.bf16.msra.mxu0 0
      %2262 = vmatprep.subr.bf16.mxu0 0
      %2263 = vmatpush1.bf16.msra.mxu0 0
      %2264 = vmatprep.subr.bf16.mxu0 0
      %2265 = vmatpush1.bf16.msra.mxu0 0
      %2266 = vmatprep.mubr.bf16.mxu0 0
      %2267 = vmatmul.mubr.bf16.gmra.mrb[0].mxu0 %v2232
      %v2268 = vpop.f32.mrb[0].mxu0
      %v2269 = vadd.f32 0.0, %v2268
      %v2270 = vpop.f32.mrb[0].mxu0
      %v2271 = vpop.f32.mrb[0].mxu0
      %v2272 = vadd.f32 0.0, %v2271
      %v2273 = vpop.f32.mrb[0].mxu0
      %2274 = vdwg.mxu0
      %2275 = vrot.lane.b32.xlu0 %v497, 64
      %v2276 = vpop.permute.xlu0 %2275
      %v2279 = vsel %vm1342, %v1707, 0
      %2281 = vmatprep.subr.bf16.mxu0 0
      %2282 = vmatpush1.bf16.msra.mxu0 %v2276
      %2283 = vmatprep.subr.bf16.mxu0 0
      %2284 = vmatpush1.bf16.msra.mxu0 0
      %2285 = vmatprep.subr.bf16.mxu0 0
      %2286 = vmatpush1.bf16.msra.mxu0 0
      %2287 = vmatprep.subr.bf16.mxu0 0
      %2288 = vmatpush1.bf16.msra.mxu0 0
      %2289 = vmatprep.subr.bf16.mxu0 0
      %2290 = vmatpush1.bf16.msra.mxu0 0
      %2291 = vmatprep.subr.bf16.mxu0 0
      %2292 = vmatpush1.bf16.msra.mxu0 0
      %2293 = vmatprep.subr.bf16.mxu0 0
      %2294 = vmatpush1.bf16.msra.mxu0 0
      %2295 = vmatprep.subr.bf16.mxu0 0
      %2296 = vmatpush1.bf16.msra.mxu0 0
      %2297 = vmatprep.subr.bf16.mxu0 0
      %2298 = vmatpush1.bf16.msra.mxu0 0
      %2299 = vmatprep.subr.bf16.mxu0 0
      %2300 = vmatpush1.bf16.msra.mxu0 0
      %2301 = vmatprep.subr.bf16.mxu0 0
      %2302 = vmatpush1.bf16.msra.mxu0 0
      %2303 = vmatprep.subr.bf16.mxu0 0
      %2304 = vmatpush1.bf16.msra.mxu0 0
      %2305 = vmatprep.subr.bf16.mxu0 0
      %2306 = vmatpush1.bf16.msra.mxu0 0
      %2307 = vmatprep.subr.bf16.mxu0 0
      %2308 = vmatpush1.bf16.msra.mxu0 0
      %2309 = vmatprep.subr.bf16.mxu0 0
      %2310 = vmatpush1.bf16.msra.mxu0 0
      %2311 = vmatprep.subr.bf16.mxu0 0
      %2312 = vmatpush1.bf16.msra.mxu0 0
      %2313 = vmatprep.mubr.bf16.mxu0 0
      %2314 = vmatmul.mubr.bf16.gmra.mrb[0].mxu0 %v2279
      %v2315 = vpop.f32.mrb[0].mxu0
      %v2316 = vadd.f32 0.0, %v2315
      %v2317 = vpop.f32.mrb[0].mxu0
      %v2318 = vpop.f32.mrb[0].mxu0
      %v2319 = vadd.f32 0.0, %v2318
      %v2320 = vpop.f32.mrb[0].mxu0
      %2321 = vdwg.mxu0
      %2322 = vrot.lane.b32.xlu0 %v498, 64
      %v2323 = vpop.permute.xlu0 %2322
      %v2326 = vsel %vm1342, %v1708, 0
      %2328 = vmatprep.subr.bf16.mxu0 0
      %2329 = vmatpush1.bf16.msra.mxu0 %v2323
      %2330 = vmatprep.subr.bf16.mxu0 0
      %2331 = vmatpush1.bf16.msra.mxu0 0
      %2332 = vmatprep.subr.bf16.mxu0 0
      %2333 = vmatpush1.bf16.msra.mxu0 0
      %2334 = vmatprep.subr.bf16.mxu0 0
      %2335 = vmatpush1.bf16.msra.mxu0 0
      %2336 = vmatprep.subr.bf16.mxu0 0
      %2337 = vmatpush1.bf16.msra.mxu0 0
      %2338 = vmatprep.subr.bf16.mxu0 0
      %2339 = vmatpush1.bf16.msra.mxu0 0
      %2340 = vmatprep.subr.bf16.mxu0 0
      %2341 = vmatpush1.bf16.msra.mxu0 0
      %2342 = vmatprep.subr.bf16.mxu0 0
      %2343 = vmatpush1.bf16.msra.mxu0 0
      %2344 = vmatprep.subr.bf16.mxu0 0
      %2345 = vmatpush1.bf16.msra.mxu0 0
      %2346 = vmatprep.subr.bf16.mxu0 0
      %2347 = vmatpush1.bf16.msra.mxu0 0
      %2348 = vmatprep.subr.bf16.mxu0 0
      %2349 = vmatpush1.bf16.msra.mxu0 0
      %2350 = vmatprep.subr.bf16.mxu0 0
      %2351 = vmatpush1.bf16.msra.mxu0 0
      %2352 = vmatprep.subr.bf16.mxu0 0
      %2353 = vmatpush1.bf16.msra.mxu0 0
      %2354 = vmatprep.subr.bf16.mxu0 0
      %2355 = vmatpush1.bf16.msra.mxu0 0
      %2356 = vmatprep.subr.bf16.mxu0 0
      %2357 = vmatpush1.bf16.msra.mxu0 0
      %2358 = vmatprep.subr.bf16.mxu0 0
      %2359 = vmatpush1.bf16.msra.mxu0 0
      %2360 = vmatprep.mubr.bf16.mxu0 0
      %2361 = vmatmul.mubr.bf16.gmra.mrb[0].mxu0 %v2326
      %v2362 = vpop.f32.mrb[0].mxu0
      %v2363 = vadd.f32 0.0, %v2362
      %v2364 = vpop.f32.mrb[0].mxu0
      %v2365 = vpop.f32.mrb[0].mxu0
      %v2366 = vadd.f32 0.0, %v2365
      %v2367 = vpop.f32.mrb[0].mxu0
      %2368 = vdwg.mxu0
      %2369 = vrot.lane.b32.xlu0 %v499, 64
      %v2370 = vpop.permute.xlu0 %2369
      %v2373 = vsel %vm1342, %v1709, 0
      %2375 = vmatprep.subr.bf16.mxu0 0
      %2376 = vmatpush1.bf16.msra.mxu0 %v2370
      %2377 = vmatprep.subr.bf16.mxu0 0
      %2378 = vmatpush1.bf16.msra.mxu0 0
      %2379 = vmatprep.subr.bf16.mxu0 0
      %2380 = vmatpush1.bf16.msra.mxu0 0
      %2381 = vmatprep.subr.bf16.mxu0 0
      %2382 = vmatpush1.bf16.msra.mxu0 0
      %2383 = vmatprep.subr.bf16.mxu0 0
      %2384 = vmatpush1.bf16.msra.mxu0 0
      %2385 = vmatprep.subr.bf16.mxu0 0
      %2386 = vmatpush1.bf16.msra.mxu0 0
      %2387 = vmatprep.subr.bf16.mxu0 0
      %2388 = vmatpush1.bf16.msra.mxu0 0
      %2389 = vmatprep.subr.bf16.mxu0 0
      %2390 = vmatpush1.bf16.msra.mxu0 0
      %2391 = vmatprep.subr.bf16.mxu0 0
      %2392 = vmatpush1.bf16.msra.mxu0 0
      %2393 = vmatprep.subr.bf16.mxu0 0
      %2394 = vmatpush1.bf16.msra.mxu0 0
      %2395 = vmatprep.subr.bf16.mxu0 0
      %2396 = vmatpush1.bf16.msra.mxu0 0
      %2397 = vmatprep.subr.bf16.mxu0 0
      %2398 = vmatpush1.bf16.msra.mxu0 0
      %2399 = vmatprep.subr.bf16.mxu0 0
      %2400 = vmatpush1.bf16.msra.mxu0 0
      %2401 = vmatprep.subr.bf16.mxu0 0
      %2402 = vmatpush1.bf16.msra.mxu0 0
      %2403 = vmatprep.subr.bf16.mxu0 0
      %2404 = vmatpush1.bf16.msra.mxu0 0
      %2405 = vmatprep.subr.bf16.mxu0 0
      %2406 = vmatpush1.bf16.msra.mxu0 0
      %2407 = vmatprep.mubr.bf16.mxu0 0
      %2408 = vmatmul.mubr.bf16.gmra.mrb[0].mxu0 %v2373
      %v2409 = vpop.f32.mrb[0].mxu0
      %v2410 = vadd.f32 0.0, %v2409
      %v2411 = vpop.f32.mrb[0].mxu0
      %v2412 = vpop.f32.mrb[0].mxu0
      %v2413 = vadd.f32 0.0, %v2412
      %v2414 = vpop.f32.mrb[0].mxu0
      %2415 = vdwg.mxu0
      %2416 = vrot.lane.b32.xlu0 %v500, 64
      %v2417 = vpop.permute.xlu0 %2416
      %v2420 = vsel %vm1342, %v1710, 0
      %2422 = vmatprep.subr.bf16.mxu0 0
      %2423 = vmatpush1.bf16.msra.mxu0 %v2417
      %2424 = vmatprep.subr.bf16.mxu0 0
      %2425 = vmatpush1.bf16.msra.mxu0 0
      %2426 = vmatprep.subr.bf16.mxu0 0
      %2427 = vmatpush1.bf16.msra.mxu0 0
      %2428 = vmatprep.subr.bf16.mxu0 0
      %2429 = vmatpush1.bf16.msra.mxu0 0
      %2430 = vmatprep.subr.bf16.mxu0 0
      %2431 = vmatpush1.bf16.msra.mxu0 0
      %2432 = vmatprep.subr.bf16.mxu0 0
      %2433 = vmatpush1.bf16.msra.mxu0 0
      %2434 = vmatprep.subr.bf16.mxu0 0
      %2435 = vmatpush1.bf16.msra.mxu0 0
      %2436 = vmatprep.subr.bf16.mxu0 0
      %2437 = vmatpush1.bf16.msra.mxu0 0
      %2438 = vmatprep.subr.bf16.mxu0 0
      %2439 = vmatpush1.bf16.msra.mxu0 0
      %2440 = vmatprep.subr.bf16.mxu0 0
      %2441 = vmatpush1.bf16.msra.mxu0 0
      %2442 = vmatprep.subr.bf16.mxu0 0
      %2443 = vmatpush1.bf16.msra.mxu0 0
      %2444 = vmatprep.subr.bf16.mxu0 0
      %2445 = vmatpush1.bf16.msra.mxu0 0
      %2446 = vmatprep.subr.bf16.mxu0 0
      %2447 = vmatpush1.bf16.msra.mxu0 0
      %2448 = vmatprep.subr.bf16.mxu0 0
      %2449 = vmatpush1.bf16.msra.mxu0 0
      %2450 = vmatprep.subr.bf16.mxu0 0
      %2451 = vmatpush1.bf16.msra.mxu0 0
      %2452 = vmatprep.subr.bf16.mxu0 0
      %2453 = vmatpush1.bf16.msra.mxu0 0
      %2454 = vmatprep.mubr.bf16.mxu0 0
      %2455 = vmatmul.mubr.bf16.gmra.mrb[0].mxu0 %v2420
      %v2456 = vpop.f32.mrb[0].mxu0
      %v2457 = vadd.f32 0.0, %v2456
      %v2458 = vpop.f32.mrb[0].mxu0
      %v2459 = vpop.f32.mrb[0].mxu0
      %v2460 = vadd.f32 0.0, %v2459
      %v2461 = vpop.f32.mrb[0].mxu0
      %2462 = vdwg.mxu0
      %v2463 = vpack.c.bf16 %v1755, %v1752
      %v2464 = vpack.c.bf16 %v1802, %v1799
      %v2465 = vpack.c.bf16 %v1849, %v1846
      %v2466 = vpack.c.bf16 %v1896, %v1893
      %v2467 = vpack.c.bf16 %v1943, %v1940
      %v2468 = vpack.c.bf16 %v1990, %v1987
      %v2469 = vpack.c.bf16 %v2037, %v2034
      %v2470 = vpack.c.bf16 %v2084, %v2081
      %v2471 = vpack.c.bf16 %v2131, %v2128
      %v2472 = vpack.c.bf16 %v2178, %v2175
      %v2473 = vpack.c.bf16 %v2225, %v2222
      %v2474 = vpack.c.bf16 %v2272, %v2269
      %v2475 = vpack.c.bf16 %v2319, %v2316
      %v2476 = vpack.c.bf16 %v2366, %v2363
      %v2477 = vpack.c.bf16 %v2413, %v2410
      %v2478 = vpack.c.bf16 %v2460, %v2457
      %v2479 = vld [vmem:[%s4] sm:$0xf]
      %s2480 = scalar_lea.vmem %s4, 4
      %v2481 = vld [vmem:[%s2480] sm:$0xf]
      %v2483 = vsel %vm504, %v2467, 0
      %v2486 = vsel %vm504, %v2468, 0
      %v2489 = vsel %vm504, %v2469, 0
      %v2492 = vsel %vm504, %v2470, 0
      %vm2494 = vcmask 1043456
      %v2496 = vsel %vm2494, %v2481, 0
      %2498 = vmatprep.subr.bf16.mxu0 0
      %2499 = vmatpush1.bf16.msra.mxu0 %v2496
      %2500 = vmatprep.subr.bf16.mxu0 0
      %2501 = vmatpush1.bf16.msra.mxu0 0
      %2502 = vmatprep.subr.bf16.mxu0 0
      %2503 = vmatpush1.bf16.msra.mxu0 0
      %2504 = vmatprep.subr.bf16.mxu0 0
      %2505 = vmatpush1.bf16.msra.mxu0 0
      %2506 = vmatprep.subr.bf16.mxu0 0
      %2507 = vmatpush1.bf16.msra.mxu0 0
      %2508 = vmatprep.subr.bf16.mxu0 0
      %2509 = vmatpush1.bf16.msra.mxu0 0
      %2510 = vmatprep.subr.bf16.mxu0 0
      %2511 = vmatpush1.bf16.msra.mxu0 0
      %2512 = vmatprep.subr.bf16.mxu0 0
      %2513 = vmatpush1.bf16.msra.mxu0 0
      %2514 = vmatprep.subr.bf16.mxu0 0
      %2515 = vmatpush1.bf16.msra.mxu0 0
      %2516 = vmatprep.subr.bf16.mxu0 0
      %2517 = vmatpush1.bf16.msra.mxu0 0
      %2518 = vmatprep.subr.bf16.mxu0 0
      %2519 = vmatpush1.bf16.msra.mxu0 0
      %2520 = vmatprep.subr.bf16.mxu0 0
      %2521 = vmatpush1.bf16.msra.mxu0 0
      %2522 = vmatprep.subr.bf16.mxu0 0
      %2523 = vmatpush1.bf16.msra.mxu0 0
      %2524 = vmatprep.subr.bf16.mxu0 0
      %2525 = vmatpush1.bf16.msra.mxu0 0
      %2526 = vmatprep.subr.bf16.mxu0 0
      %2527 = vmatpush1.bf16.msra.mxu0 0
      %2528 = vmatprep.subr.bf16.mxu0 0
      %2529 = vmatpush1.bf16.msra.mxu0 0
      %2530 = vmatprep.mubr.bf16.mxu0 0
      %2531 = vmatmul.mubr.bf16.gmra.mrb[0].mxu0 %v2483
      %v2532 = vpop.f32.mrb[0].mxu0
      %v2533 = vadd.f32 0.0, %v2532
      %v2534 = vpop.f32.mrb[0].mxu0
      %v2535 = vpop.f32.mrb[0].mxu0
      %v2536 = vadd.f32 0.0, %v2535
      %v2537 = vpop.f32.mrb[0].mxu0
      %2538 = vmatprep.mubr.bf16.mxu0 0
      %2539 = vmatmul.mubr.bf16.gmra.mrb[0].mxu0 %v2486
      %v2540 = vpop.f32.mrb[0].mxu0
      %v2541 = vadd.f32 0.0, %v2540
      %v2542 = vpop.f32.mrb[0].mxu0
      %v2543 = vpop.f32.mrb[0].mxu0
      %v2544 = vadd.f32 0.0, %v2543
      %v2545 = vpop.f32.mrb[0].mxu0
      %2546 = vmatprep.mubr.bf16.mxu0 0
      %2547 = vmatmul.mubr.bf16.gmra.mrb[0].mxu0 %v2489
      %v2548 = vpop.f32.mrb[0].mxu0
      %v2549 = vadd.f32 0.0, %v2548
      %v2550 = vpop.f32.mrb[0].mxu0
      %v2551 = vpop.f32.mrb[0].mxu0
      %v2552 = vadd.f32 0.0, %v2551
      %v2553 = vpop.f32.mrb[0].mxu0
      %2554 = vmatprep.mubr.bf16.mxu0 0
      %2555 = vmatmul.mubr.bf16.gmra.mrb[0].mxu0 %v2492
      %v2556 = vpop.f32.mrb[0].mxu0
      %v2557 = vadd.f32 0.0, %v2556
      %v2558 = vpop.f32.mrb[0].mxu0
      %v2559 = vpop.f32.mrb[0].mxu0
      %v2560 = vadd.f32 0.0, %v2559
      %v2561 = vpop.f32.mrb[0].mxu0
      %2562 = vdwg.mxu0
      %v2564 = vsel %vm504, %v2463, 0
      %v2567 = vsel %vm504, %v2464, 0
      %v2570 = vsel %vm504, %v2465, 0
      %v2573 = vsel %vm504, %v2466, 0
      %v2576 = vsel %vm2494, %v2479, 0
      %2578 = vmatprep.subr.bf16.mxu0 0
      %2579 = vmatpush1.bf16.msra.mxu0 %v2576
      %2580 = vmatprep.subr.bf16.mxu0 0
      %2581 = vmatpush1.bf16.msra.mxu0 0
      %2582 = vmatprep.subr.bf16.mxu0 0
      %2583 = vmatpush1.bf16.msra.mxu0 0
      %2584 = vmatprep.subr.bf16.mxu0 0
      %2585 = vmatpush1.bf16.msra.mxu0 0
      %2586 = vmatprep.subr.bf16.mxu0 0
      %2587 = vmatpush1.bf16.msra.mxu0 0
      %2588 = vmatprep.subr.bf16.mxu0 0
      %2589 = vmatpush1.bf16.msra.mxu0 0
      %2590 = vmatprep.subr.bf16.mxu0 0
      %2591 = vmatpush1.bf16.msra.mxu0 0
      %2592 = vmatprep.subr.bf16.mxu0 0
      %2593 = vmatpush1.bf16.msra.mxu0 0
      %2594 = vmatprep.subr.bf16.mxu0 0
      %2595 = vmatpush1.bf16.msra.mxu0 0
      %2596 = vmatprep.subr.bf16.mxu0 0
      %2597 = vmatpush1.bf16.msra.mxu0 0
      %2598 = vmatprep.subr.bf16.mxu0 0
      %2599 = vmatpush1.bf16.msra.mxu0 0
      %2600 = vmatprep.subr.bf16.mxu0 0
      %2601 = vmatpush1.bf16.msra.mxu0 0
      %2602 = vmatprep.subr.bf16.mxu0 0
      %2603 = vmatpush1.bf16.msra.mxu0 0
      %2604 = vmatprep.subr.bf16.mxu0 0
      %2605 = vmatpush1.bf16.msra.mxu0 0
      %2606 = vmatprep.subr.bf16.mxu0 0
      %2607 = vmatpush1.bf16.msra.mxu0 0
      %2608 = vmatprep.subr.bf16.mxu0 0
      %2609 = vmatpush1.bf16.msra.mxu0 0
      %2610 = vmatprep.mubr.bf16.mxu0 0
      %2611 = vmatmul.mubr.bf16.gmra.mrb[0].mxu0 %v2564
      %v2612 = vpop.f32.mrb[0].mxu0
      %v2613 = vadd.f32 %v2533, %v2612
      %v2614 = vpop.f32.mrb[0].mxu0
      %v2615 = vpop.f32.mrb[0].mxu0
      %v2616 = vadd.f32 %v2536, %v2615
      %v2617 = vpop.f32.mrb[0].mxu0
      %2618 = vmatprep.mubr.bf16.mxu0 0
      %2619 = vmatmul.mubr.bf16.gmra.mrb[0].mxu0 %v2567
      %v2620 = vpop.f32.mrb[0].mxu0
      %v2621 = vadd.f32 %v2541, %v2620
      %v2622 = vpop.f32.mrb[0].mxu0
      %v2623 = vpop.f32.mrb[0].mxu0
      %v2624 = vadd.f32 %v2544, %v2623
      %v2625 = vpop.f32.mrb[0].mxu0
      %2626 = vmatprep.mubr.bf16.mxu0 0
      %2627 = vmatmul.mubr.bf16.gmra.mrb[0].mxu0 %v2570
      %v2628 = vpop.f32.mrb[0].mxu0
      %v2629 = vadd.f32 %v2549, %v2628
      %v2630 = vpop.f32.mrb[0].mxu0
      %v2631 = vpop.f32.mrb[0].mxu0
      %v2632 = vadd.f32 %v2552, %v2631
      %v2633 = vpop.f32.mrb[0].mxu0
      %2634 = vmatprep.mubr.bf16.mxu0 0
      %2635 = vmatmul.mubr.bf16.gmra.mrb[0].mxu0 %v2573
      %v2636 = vpop.f32.mrb[0].mxu0
      %v2637 = vadd.f32 %v2557, %v2636
      %v2638 = vpop.f32.mrb[0].mxu0
      %v2639 = vpop.f32.mrb[0].mxu0
      %v2640 = vadd.f32 %v2560, %v2639
      %v2641 = vpop.f32.mrb[0].mxu0
      %2642 = vdwg.mxu0
      %s2643 = scalar_lea.vmem %s4, 8
      %v2644 = vld [vmem:[%s2643] sm:$0xf]
      %v2646 = vsel %vm504, %v2471, 0
      %v2649 = vsel %vm504, %v2472, 0
      %v2652 = vsel %vm504, %v2473, 0
      %v2655 = vsel %vm504, %v2474, 0
      %v2658 = vsel %vm2494, %v2644, 0
      %2660 = vmatprep.subr.bf16.mxu0 0
      %2661 = vmatpush1.bf16.msra.mxu0 %v2658
      %2662 = vmatprep.subr.bf16.mxu0 0
      %2663 = vmatpush1.bf16.msra.mxu0 0
      %2664 = vmatprep.subr.bf16.mxu0 0
      %2665 = vmatpush1.bf16.msra.mxu0 0
      %2666 = vmatprep.subr.bf16.mxu0 0
      %2667 = vmatpush1.bf16.msra.mxu0 0
      %2668 = vmatprep.subr.bf16.mxu0 0
      %2669 = vmatpush1.bf16.msra.mxu0 0
      %2670 = vmatprep.subr.bf16.mxu0 0
      %2671 = vmatpush1.bf16.msra.mxu0 0
      %2672 = vmatprep.subr.bf16.mxu0 0
      %2673 = vmatpush1.bf16.msra.mxu0 0
      %2674 = vmatprep.subr.bf16.mxu0 0
      %2675 = vmatpush1.bf16.msra.mxu0 0
      %2676 = vmatprep.subr.bf16.mxu0 0
      %2677 = vmatpush1.bf16.msra.mxu0 0
      %2678 = vmatprep.subr.bf16.mxu0 0
      %2679 = vmatpush1.bf16.msra.mxu0 0
      %2680 = vmatprep.subr.bf16.mxu0 0
      %2681 = vmatpush1.bf16.msra.mxu0 0
      %2682 = vmatprep.subr.bf16.mxu0 0
      %2683 = vmatpush1.bf16.msra.mxu0 0
      %2684 = vmatprep.subr.bf16.mxu0 0
      %2685 = vmatpush1.bf16.msra.mxu0 0
      %2686 = vmatprep.subr.bf16.mxu0 0
      %2687 = vmatpush1.bf16.msra.mxu0 0
      %2688 = vmatprep.subr.bf16.mxu0 0
      %2689 = vmatpush1.bf16.msra.mxu0 0
      %2690 = vmatprep.subr.bf16.mxu0 0
      %2691 = vmatpush1.bf16.msra.mxu0 0
      %2692 = vmatprep.mubr.bf16.mxu0 0
      %2693 = vmatmul.mubr.bf16.gmra.mrb[0].mxu0 %v2646
      %v2694 = vpop.f32.mrb[0].mxu0
      %v2695 = vadd.f32 0.0, %v2694
      %v2696 = vpop.f32.mrb[0].mxu0
      %v2697 = vpop.f32.mrb[0].mxu0
      %v2698 = vadd.f32 0.0, %v2697
      %v2699 = vpop.f32.mrb[0].mxu0
      %2700 = vmatprep.mubr.bf16.mxu0 0
      %2701 = vmatmul.mubr.bf16.gmra.mrb[0].mxu0 %v2649
      %v2702 = vpop.f32.mrb[0].mxu0
      %v2703 = vadd.f32 0.0, %v2702
      %v2704 = vpop.f32.mrb[0].mxu0
      %v2705 = vpop.f32.mrb[0].mxu0
      %v2706 = vadd.f32 0.0, %v2705
      %v2707 = vpop.f32.mrb[0].mxu0
      %2708 = vmatprep.mubr.bf16.mxu0 0
      %2709 = vmatmul.mubr.bf16.gmra.mrb[0].mxu0 %v2652
      %v2710 = vpop.f32.mrb[0].mxu0
      %v2711 = vadd.f32 0.0, %v2710
      %v2712 = vpop.f32.mrb[0].mxu0
      %v2713 = vpop.f32.mrb[0].mxu0
      %v2714 = vadd.f32 0.0, %v2713
      %v2715 = vpop.f32.mrb[0].mxu0
      %2716 = vmatprep.mubr.bf16.mxu0 0
      %2717 = vmatmul.mubr.bf16.gmra.mrb[0].mxu0 %v2655
      %v2718 = vpop.f32.mrb[0].mxu0
      %v2719 = vadd.f32 0.0, %v2718
      %v2720 = vpop.f32.mrb[0].mxu0
      %v2721 = vpop.f32.mrb[0].mxu0
      %v2722 = vadd.f32 0.0, %v2721
      %v2723 = vpop.f32.mrb[0].mxu0
      %2724 = vdwg.mxu0
      %v2725 = vadd.f32 %v2613, %v2695
      %v2726 = vadd.f32 %v2616, %v2698
      %v2727 = vadd.f32 %v2621, %v2703
      %v2728 = vadd.f32 %v2624, %v2706
      %v2729 = vadd.f32 %v2629, %v2711
      %v2730 = vadd.f32 %v2632, %v2714
      %v2731 = vadd.f32 %v2637, %v2719
      %v2732 = vadd.f32 %v2640, %v2722
      %s2733 = scalar_lea.vmem %s4, 12
      %v2734 = vld [vmem:[%s2733] sm:$0xf]
      %v2736 = vsel %vm504, %v2475, 0
      %v2739 = vsel %vm504, %v2476, 0
      %v2742 = vsel %vm504, %v2477, 0
      %v2745 = vsel %vm504, %v2478, 0
      %v2748 = vsel %vm2494, %v2734, 0
      %2750 = vmatprep.subr.bf16.mxu0 0
      %2751 = vmatpush1.bf16.msra.mxu0 %v2748
      %2752 = vmatprep.subr.bf16.mxu0 0
      %2753 = vmatpush1.bf16.msra.mxu0 0
      %2754 = vmatprep.subr.bf16.mxu0 0
      %2755 = vmatpush1.bf16.msra.mxu0 0
      %2756 = vmatprep.subr.bf16.mxu0 0
      %2757 = vmatpush1.bf16.msra.mxu0 0
      %2758 = vmatprep.subr.bf16.mxu0 0
      %2759 = vmatpush1.bf16.msra.mxu0 0
      %2760 = vmatprep.subr.bf16.mxu0 0
      %2761 = vmatpush1.bf16.msra.mxu0 0
      %2762 = vmatprep.subr.bf16.mxu0 0
      %2763 = vmatpush1.bf16.msra.mxu0 0
      %2764 = vmatprep.subr.bf16.mxu0 0
      %2765 = vmatpush1.bf16.msra.mxu0 0
      %2766 = vmatprep.subr.bf16.mxu0 0
      %2767 = vmatpush1.bf16.msra.mxu0 0
      %2768 = vmatprep.subr.bf16.mxu0 0
      %2769 = vmatpush1.bf16.msra.mxu0 0
      %2770 = vmatprep.subr.bf16.mxu0 0
      %2771 = vmatpush1.bf16.msra.mxu0 0
      %2772 = vmatprep.subr.bf16.mxu0 0
      %2773 = vmatpush1.bf16.msra.mxu0 0
      %2774 = vmatprep.subr.bf16.mxu0 0
      %2775 = vmatpush1.bf16.msra.mxu0 0
      %2776 = vmatprep.subr.bf16.mxu0 0
      %2777 = vmatpush1.bf16.msra.mxu0 0
      %2778 = vmatprep.subr.bf16.mxu0 0
      %2779 = vmatpush1.bf16.msra.mxu0 0
      %2780 = vmatprep.subr.bf16.mxu0 0
      %2781 = vmatpush1.bf16.msra.mxu0 0
      %2782 = vmatprep.mubr.bf16.mxu0 0
      %2783 = vmatmul.mubr.bf16.gmra.mrb[0].mxu0 %v2736
      %v2784 = vpop.f32.mrb[0].mxu0
      %v2785 = vadd.f32 0.0, %v2784
      %v2786 = vpop.f32.mrb[0].mxu0
      %v2787 = vpop.f32.mrb[0].mxu0
      %v2788 = vadd.f32 0.0, %v2787
      %v2789 = vpop.f32.mrb[0].mxu0
      %2790 = vmatprep.mubr.bf16.mxu0 0
      %2791 = vmatmul.mubr.bf16.gmra.mrb[0].mxu0 %v2739
      %v2792 = vpop.f32.mrb[0].mxu0
      %v2793 = vadd.f32 0.0, %v2792
      %v2794 = vpop.f32.mrb[0].mxu0
      %v2795 = vpop.f32.mrb[0].mxu0
      %v2796 = vadd.f32 0.0, %v2795
      %v2797 = vpop.f32.mrb[0].mxu0
      %2798 = vmatprep.mubr.bf16.mxu0 0
      %2799 = vmatmul.mubr.bf16.gmra.mrb[0].mxu0 %v2742
      %v2800 = vpop.f32.mrb[0].mxu0
      %v2801 = vadd.f32 0.0, %v2800
      %v2802 = vpop.f32.mrb[0].mxu0
      %v2803 = vpop.f32.mrb[0].mxu0
      %v2804 = vadd.f32 0.0, %v2803
      %v2805 = vpop.f32.mrb[0].mxu0
      %2806 = vmatprep.mubr.bf16.mxu0 0
      %2807 = vmatmul.mubr.bf16.gmra.mrb[0].mxu0 %v2745
      %v2808 = vpop.f32.mrb[0].mxu0
      %v2809 = vadd.f32 0.0, %v2808
      %v2810 = vpop.f32.mrb[0].mxu0
      %v2811 = vpop.f32.mrb[0].mxu0
      %v2812 = vadd.f32 0.0, %v2811
      %v2813 = vpop.f32.mrb[0].mxu0
      %2814 = vdwg.mxu0
      %v2815 = vadd.f32 %v2725, %v2785
      %v2816 = vadd.f32 %v2726, %v2788
      %v2817 = vadd.f32 %v2727, %v2793
      %v2818 = vadd.f32 %v2728, %v2796
      %v2819 = vadd.f32 %v2729, %v2801
      %v2820 = vadd.f32 %v2730, %v2804
      %v2821 = vadd.f32 %v2731, %v2809
      %v2822 = vadd.f32 %v2732, %v2812
      %v2823 = vld [vmem:[%s5] sm:$0x1]
      %v2825 = vlaneseq
      %v2826 = vshrl.u32 %v2825, 7
      %v2827 = vsub.s32 0, %v2826
      %v2828 = vrot.slane %v2823, %v2827
      %v2830 = vadd.f32 %v2815, %v2828
      %v2831 = vadd.f32 %v2816, %v2828
      %v2832 = vadd.f32 %v2817, %v2828
      %v2833 = vadd.f32 %v2818, %v2828
      %v2834 = vadd.f32 %v2819, %v2828
      %v2835 = vadd.f32 %v2820, %v2828
      %v2836 = vadd.f32 %v2821, %v2828
      %v2837 = vadd.f32 %v2822, %v2828
      %2838 = vst.msk [vmem:[%s289] sm:$0xff] %vm327, %v2830
      %2839 = vst.msk [vmem:[%s289 + $0x8] sm:$0xff] %vm327, %v2831
      %2840 = vst.msk [vmem:[%s289 + $0x10] sm:$0xff] %vm327, %v2832
      %2841 = vst.msk [vmem:[%s289 + $0x18] sm:$0xff] %vm327, %v2833
      %2842 = vst.msk [vmem:[%s289 + $0x20] sm:$0xff] %vm327, %v2834
      %2843 = vst.msk [vmem:[%s289 + $0x28] sm:$0xff] %vm327, %v2835
      %2844 = vst.msk [vmem:[%s289 + $0x30] sm:$0xff] %vm327, %v2836
      %2845 = vst.msk [vmem:[%s289 + $0x38] sm:$0xff] %vm327, %v2837
      %s2846 = smul.u32 8, %s22
      %p2847 = scmp.lt.s32.totalorder %s21, 1
      %s2848 = scalar_select %p2847, %s21, 1
      %p2849 = scmp.lt.s32.totalorder %s2846, 7
      %s2850 = scalar_select %p2849, %s2846, 7
      %s2851 = smul.addr %s2848, 8
      %s2852 = sadd.s32 %s2850, %s2851
      %s2853 = smul.addr %s2852, 8
      %s2854 = scalar_lea.vmem %s6, %s2853
      // Predicated region
      $region45: #{tpu_custom_call.1} parent=43 // pred_check
        %p2855 = pneg %p182
      $region46: #{tpu_custom_call.1} parent=43 // pred_check_branch
        %2857 = sbr.rel (%p2855) target = $region48
      $region47: #{tpu_custom_call.1} parent=43 // pred_region
        %s2858 = smul.u32 8, %s22
      $region48: #{tpu_custom_call.1} parent=43 // pred_fallthru
        _
    $region44: #{tpu_custom_call.1} parent=5 // pred_fallthru
      _
    %p2859 = scmp.le.s32.totalorder 2, %s12
    // Predicated region
    $region49: #{tpu_custom_call.1} parent=5 // pred_check
      %p2860 = pneg %p2859
    $region50: #{tpu_custom_call.1} parent=5 // pred_check_branch
      %2862 = sbr.rel (%p2860) target = $region52
    $region51: #{tpu_custom_call.1} parent=5 // pred_region
      %s2863 = ssub.s32 %s12, 2
      // Predicated region
      $region53: #{tpu_custom_call.1} parent=51 // pred_check
        %p2864 = pneg %p188
      $region54: #{tpu_custom_call.1} parent=51 // pred_check_branch
        %2866 = sbr.rel (%p2864) target = $region56
      $region55: #{tpu_custom_call.1} parent=51 // pred_region
        %s2867 = smul.u32 8, %s24
        %p2868 = scmp.lt.s32.totalorder %s23, 1
        %s2869 = scalar_select %p2868, %s23, 1
        %p2870 = scmp.lt.s32.totalorder %s2867, 7
        %s2871 = scalar_select %p2870, %s2867, 7
        %s2872 = smul.addr %s2869, 8
        %s2873 = sadd.s32 %s2871, %s2872
        %s2874 = smul.addr %s2873, 8
        %s2875 = scalar_lea.vmem %s6, %s2874
      $region56: #{tpu_custom_call.1} parent=51 // pred_fallthru
        _
    $region52: #{tpu_custom_call.1} parent=5 // pred_fallthru
      _
  $region6: #{tpu_custom_call.1} parent=0 // loop_footer
    %s16 = sadd.s32 1, %s12
  $region7: #{tpu_custom_call.1} parent=0 // loop_footer_branch
    %11 = sbr.rel target = $region3
  $region8: #{tpu_custom_call.1} parent=0 // loop_exit
    _

</llo_original>
